<compile_context>
chip_gen: v5e
topology: v5e:2x2
jax: 0.10.0
libtpu: 0.0.40
codegen_flags: <defaults>
</compile_context>

<pallas_src>
import numpy as np
import jax
import jax.numpy as jnp
from jax import lax
from jax.experimental import pallas as pl
from jax.experimental.pallas import tpu as pltpu


# ------------------------------------------------------------------ masks ---
def _build_conv_mask(k, exclusive):
    """Autoregressive kernel mask identical to MaskedConv2d.__init__."""
    m = np.ones((k, k), np.float32)
    m[k // 2, k // 2 + (0 if exclusive else 1):] = 0.0
    m[k // 2 + 1:, :] = 0.0
    return m


def _mask_taps(mask_np):
    k = mask_np.shape[0]
    return tuple((dh, dw) for dh in range(k) for dw in range(k)
                 if mask_np[dh, dw] > 0)


# ----------------------------------------------------------- fused kernel ---
def _make_fused_kernel(C, T, T1, shifts):
    """One grid step = TB images, activations channel-major (C, N=TB*H*W)."""

    def kernel(x_ref, m_ref, w1_ref, b1_ref, a2_ref, w2_ref, b2_ref,
               a3_ref, w3_ref, b3_ref, xm_ref, xb_ref, o_ref):
        x = x_ref[0]                                   # (1, N) lane-dense input
        masks = m_ref[...]                             # (T, N) tap validity

        def tap(v, t):
            # v shifted so lane p reads source p - shifts[t]; invalid (out of
            # image / cross-image / circular-wrap) lanes are zeroed by the mask.
            s = shifts[t]
            r = pltpu.roll(v, s, axis=1) if s else v   # XLU lane rotation
            return r * masks[t:t + 1, :]

        N = x.shape[1]

        # ---- layer 1: exclusive masked conv, Cin=1 -> VPU rank-1 updates ----
        w1 = w1_ref[...]                               # (C, T1)
        h = jnp.zeros((C, N), jnp.float32)
        for t in range(T1):                            # unrolled (4 taps)
            h = h + w1[:, t:t + 1] * tap(x, t)         # (C,1)*(1,N) -> (C,N)
        h = h + b1_ref[...]

        # ---- layer 2: PReLU + masked conv 32->32 (MXU, lane-dense N) --------
        a = jnp.where(h > 0, h, h * a2_ref[...])
        h2 = jnp.zeros((C, N), jnp.float32)
        for t in range(T):                             # unrolled (5 taps)
            h2 = h2 + jnp.dot(w2_ref[t], tap(a, t),
                              preferred_element_type=jnp.float32)
        h2 = h2 + b2_ref[...]

        # ---- layer 3: PReLU + masked conv 32->1 (VPU FMA + sublane reduce) --
        a = jnp.where(h2 > 0, h2, h2 * a3_ref[...])
        w3 = w3_ref[...]                               # (C, T)
        acc = jnp.zeros((C, N), jnp.float32)
        for t in range(T):
            acc = acc + w3[:, t:t + 1] * tap(a, t)
        z = jnp.sum(acc, axis=0, keepdims=True) + b3_ref[...]     # (1, N)

        # ---- head: sigmoid (EUP exp + approx recip), x_hat mask / bias ------
        y = pl.reciprocal(1.0 + jnp.exp(-z), approx=True)
        o_ref[0] = y * xm_ref[...] + xb_ref[...]       # lane-dense store

    return kernel


# ---------------------------------------------------------------- wrapper ---
def make_pixelcnn_forward(L, net_width, khalf, batch_tile=8):
    H = W = L
    C = net_width
    HW = H * W
    k = 2 * khalf + 1
    taps = _mask_taps(_build_conv_mask(k, exclusive=False))   # non-excl taps
    T = len(taps)
    T1 = T - 1                                   # exclusive taps == taps[:-1]
    # lane shift so that result[p] = act[p - shift] reads source (i+dh-k/2, j+dw-k/2)
    shifts = tuple((khalf - dh) * W + (khalf - dw) for dh, dw in taps)

    def tap_mask(dh, dw):
        p = np.arange(HW)
        ii, jj = p // W, p % W
        si, sj = ii + dh - khalf, jj + dw - khalf
        return ((si >= 0) & (si < H) & (sj >= 0) & (sj < W)).astype(np.float32)

    kernel = _make_fused_kernel(C, T, T1, shifts)

    def forward(params, x_nchw):
        B = x_nchw.shape[0]
        # >=2 grid steps when B>=2 (v7x has 2 TCs), TB<=batch_tile images/step.
        TB = max(1, min(batch_tile, -(-B // 2)))
        G = -(-B // TB)
        Bp = G * TB
        N = TB * HW

        x = x_nchw.astype(jnp.float32).reshape(B, HW)
        if Bp != B:
            x = jnp.concatenate([x, jnp.zeros((Bp - B, HW), jnp.float32)], 0)
        x = x.reshape(G, 1, N)                                     # lane-dense

        # per-tap validity masks (also zero cross-image lanes), tiled over TB
        masks = jnp.asarray(
            np.stack([np.tile(tap_mask(dh, dw), TB) for dh, dw in taps], 0))

        # weights packed channel-major for the (C, N) activation layout
        w1 = jnp.stack([params['w1'][dh, dw, 0, :] for dh, dw in taps[:T1]], 1)
        w2 = jnp.stack([params['w2'][dh, dw].T for dh, dw in taps], 0)  # (T,C,C)
        w3 = jnp.stack([params['w3'][dh, dw, :, 0] for dh, dw in taps], 1)
        b1 = params['b1'].reshape(C, 1)
        a2 = params['alpha2'].reshape(C, 1)
        b2 = params['b2'].reshape(C, 1)
        a3 = params['alpha3'].reshape(C, 1)
        b3 = params['b3'].reshape(1, 1)
        xm = jnp.tile(params['x_hat_mask'].reshape(1, HW), (1, TB))
        xb = jnp.tile(params['x_hat_bias'].reshape(1, HW), (1, TB))

        y = pl.pallas_call(
            kernel,
            out_shape=jax.ShapeDtypeStruct((G, 1, N), jnp.float32),
            grid=(G,),
            in_specs=[
                pl.BlockSpec((1, 1, N), lambda b: (b, 0, 0)),   # x (lane-dense)
                pl.BlockSpec((T, N), lambda b: (0, 0)),         # tap masks
                pl.BlockSpec((C, T1), lambda b: (0, 0)),        # w1 columns
                pl.BlockSpec((C, 1), lambda b: (0, 0)),         # b1
                pl.BlockSpec((C, 1), lambda b: (0, 0)),         # alpha2
                pl.BlockSpec((T, C, C), lambda b: (0, 0, 0)),   # w2 (cout,cin)/tap
                pl.BlockSpec((C, 1), lambda b: (0, 0)),         # b2
                pl.BlockSpec((C, 1), lambda b: (0, 0)),         # alpha3
                pl.BlockSpec((C, T), lambda b: (0, 0)),         # w3 columns
                pl.BlockSpec((1, 1), lambda b: (0, 0)),         # b3
                pl.BlockSpec((1, N), lambda b: (0, 0)),         # x_hat_mask
                pl.BlockSpec((1, N), lambda b: (0, 0)),         # x_hat_bias
            ],
            out_specs=pl.BlockSpec((1, 1, N), lambda b: (b, 0, 0)),
            compiler_params=pltpu.CompilerParams(
                dimension_semantics=("parallel",)),
        )(x, masks, w1, b1, a2, w2, b2, a3, w3, b3, xm, xb)

        return y.reshape(Bp, 1, H, W)[:B]                        # NCHW

    return jax.jit(forward)


# ----------------------------------------------------------------- params ---
def init_params(key, L, net_width, khalf, q=1):
    k = 2 * khalf + 1
    keys = jax.random.split(key, 6)
    mask_ex = _build_conv_mask(k, exclusive=True)
    mask_ne = _build_conv_mask(k, exclusive=False)

    def mk_w(kk, cin, cout, mask):
        # synthetic init; replicate MaskedConv2d masking + rescale
        w = 0.1 * jax.random.normal(kk, (k, k, cin, cout), jnp.float32)
        scale = np.sqrt(mask.size / mask.sum())
        return w * jnp.asarray(mask)[:, :, None, None] * scale

    params = {
        'w1': mk_w(keys[0], 1, net_width, mask_ex),
        'b1': 0.01 * jax.random.normal(keys[1], (net_width,), jnp.float32),
        'alpha2': 0.5 * jnp.ones((net_width,), jnp.float32),   # PReLU init=0.5
        'w2': mk_w(keys[2], net_width, net_width, mask_ne),
        'b2': 0.01 * jax.random.normal(keys[3], (net_width,), jnp.float32),
        'alpha3': 0.5 * jnp.ones((net_width,), jnp.float32),
        'w3': mk_w(keys[4], net_width, q, mask_ne),
        'b3': 0.01 * jax.random.normal(keys[5], (q,), jnp.float32),
    }
    x_hat_mask = np.ones((L, L), np.float32); x_hat_mask[0, 0] = 0.0
    x_hat_bias = np.zeros((L, L), np.float32); x_hat_bias[0, 0] = 0.5
    params['x_hat_mask'] = jnp.asarray(x_hat_mask)
    params['x_hat_bias'] = jnp.asarray(x_hat_bias)
    return params


# ------------------------------------------------------ pure-JAX reference --
def reference_forward(params, x_nchw, khalf):
    def conv(x, w, b):
        y = lax.conv_general_dilated(
            x, w, (1, 1), [(khalf, khalf), (khalf, khalf)],
            dimension_numbers=('NHWC', 'HWIO', 'NHWC'))
        return y + b[None, None, None, :]

    def prelu(x, a):
        return jnp.where(x > 0, x, x * a[None, None, None, :])

    x = jnp.transpose(x_nchw, (0, 2, 3, 1)).astype(jnp.float32)
    h = conv(x, params['w1'], params['b1'])
    h = conv(prelu(h, params['alpha2']), params['w2'], params['b2'])
    h = conv(prelu(h, params['alpha3']), params['w3'], params['b3'])
    y = jax.nn.sigmoid(h)
    y = (y * params['x_hat_mask'][None, :, :, None]
         + params['x_hat_bias'][None, :, :, None])
    return jnp.transpose(y, (0, 3, 1, 2))


# ------------------------------------------------------------------- main ---
if __name__ == "__main__":
    L, B, net_width, khalf = 16, 4, 32, 1
    key = jax.random.PRNGKey(0)
    kp, kx = jax.random.split(key)
    params = init_params(kp, L, net_width, khalf)

    # Ising-style +/-1 spin configuration, NCHW like the PyTorch module.
    x = jax.random.bernoulli(kx, 0.5, (B, 1, L, L)).astype(jnp.float32) * 2.0 - 1.0

    forward = make_pixelcnn_forward(L, net_width, khalf)
    y = jax.block_until_ready(forward(params, x))

    y_ref = reference_forward(params, x, khalf)
    # tolerance loosened slightly for the approx-reciprocal sigmoid
    np.testing.assert_allclose(np.asarray(y), np.asarray(y_ref),
                               rtol=2e-3, atol=2e-3)
    print("KERNEL_OK")
</pallas_src>

<mosaic_0001>
module attributes {stable_mosaic.version = 11 : i64} {
  func.func @kernel(%arg0: i32, %arg1: memref<1x1x512xf32, #tpu.memory_space<vmem>>, %arg2: memref<5x512xf32, #tpu.memory_space<vmem>>, %arg3: memref<32x4xf32, #tpu.memory_space<vmem>>, %arg4: memref<32x1xf32, #tpu.memory_space<vmem>>, %arg5: memref<32x1xf32, #tpu.memory_space<vmem>>, %arg6: memref<5x32x32xf32, #tpu.memory_space<vmem>>, %arg7: memref<32x1xf32, #tpu.memory_space<vmem>>, %arg8: memref<32x1xf32, #tpu.memory_space<vmem>>, %arg9: memref<32x5xf32, #tpu.memory_space<vmem>>, %arg10: memref<1x1xf32, #tpu.memory_space<vmem>>, %arg11: memref<1x512xf32, #tpu.memory_space<vmem>>, %arg12: memref<1x512xf32, #tpu.memory_space<vmem>>, %arg13: memref<1x1x512xf32, #tpu.memory_space<vmem>>) attributes {dimension_semantics = [#tpu.dimension_semantics<parallel>], iteration_bounds = array<i64: 2>, scalar_prefetch = 0 : i64, scratch_operands = 0 : i64, tpu.core_type = #tpu.core_type<tc>, window_params = [{transform_indices = @transform_0, window_bounds = array<i64: 1, 1, 512>}, {pipeline_mode = #tpu.pipeline_mode<synchronous>, transform_indices = @transform_1, window_bounds = array<i64: 5, 512>}, {pipeline_mode = #tpu.pipeline_mode<synchronous>, transform_indices = @transform_2, window_bounds = array<i64: 32, 4>}, {pipeline_mode = #tpu.pipeline_mode<synchronous>, transform_indices = @transform_3, window_bounds = array<i64: 32, 1>}, {pipeline_mode = #tpu.pipeline_mode<synchronous>, transform_indices = @transform_4, window_bounds = array<i64: 32, 1>}, {pipeline_mode = #tpu.pipeline_mode<synchronous>, transform_indices = @transform_5, window_bounds = array<i64: 5, 32, 32>}, {pipeline_mode = #tpu.pipeline_mode<synchronous>, transform_indices = @transform_6, window_bounds = array<i64: 32, 1>}, {pipeline_mode = #tpu.pipeline_mode<synchronous>, transform_indices = @transform_7, window_bounds = array<i64: 32, 1>}, {pipeline_mode = #tpu.pipeline_mode<synchronous>, transform_indices = @transform_8, window_bounds = array<i64: 32, 5>}, {pipeline_mode = #tpu.pipeline_mode<synchronous>, transform_indices = @transform_9, window_bounds = array<i64: 1, 1>}, {pipeline_mode = #tpu.pipeline_mode<synchronous>, transform_indices = @transform_10, window_bounds = array<i64: 1, 512>}, {pipeline_mode = #tpu.pipeline_mode<synchronous>, transform_indices = @transform_11, window_bounds = array<i64: 1, 512>}, {transform_indices = @transform_12, window_bounds = array<i64: 1, 1, 512>}]} {
    %c0 = arith.constant 0 : index
    %c0_0 = arith.constant 0 : index
    %c0_1 = arith.constant 0 : index
    %0 = vector.load %arg1[%c0, %c0_0, %c0_1] : memref<1x1x512xf32, #tpu.memory_space<vmem>>, vector<1x1x512xf32>
    %1 = vector.shape_cast %0 : vector<1x1x512xf32> to vector<1x512xf32>
    %c0_2 = arith.constant 0 : index
    %c0_3 = arith.constant 0 : index
    %2 = vector.load %arg2[%c0_2, %c0_3] : memref<5x512xf32, #tpu.memory_space<vmem>>, vector<5x512xf32>
    %c0_4 = arith.constant 0 : index
    %c0_5 = arith.constant 0 : index
    %3 = vector.load %arg3[%c0_4, %c0_5] : memref<32x4xf32, #tpu.memory_space<vmem>>, vector<32x4xf32>
    %cst = arith.constant 0.000000e+00 : f32
    %4 = vector.broadcast %cst : f32 to vector<32x512xf32>
    %5 = vector.extract_strided_slice %3 {offsets = [0, 0], sizes = [32, 1], strides = [1, 1]} : vector<32x4xf32> to vector<32x1xf32>
    %c17_i32 = arith.constant 17 : i32
    %6 = tpu.dynamic_rotate %1 by %c17_i32 dim 1 : vector<1x512xf32>, i32 -> vector<1x512xf32>
    %7 = vector.extract_strided_slice %2 {offsets = [0, 0], sizes = [1, 512], strides = [1, 1]} : vector<5x512xf32> to vector<1x512xf32>
    %8 = arith.mulf %6, %7 : vector<1x512xf32>
    %9 = vector.broadcast %5 : vector<32x1xf32> to vector<32x512xf32>
    %10 = vector.broadcast %8 : vector<1x512xf32> to vector<32x512xf32>
    %11 = arith.mulf %9, %10 : vector<32x512xf32>
    %12 = arith.addf %4, %11 : vector<32x512xf32>
    %13 = vector.extract_strided_slice %3 {offsets = [0, 1], sizes = [32, 1], strides = [1, 1]} : vector<32x4xf32> to vector<32x1xf32>
    %c16_i32 = arith.constant 16 : i32
    %14 = tpu.dynamic_rotate %1 by %c16_i32 dim 1 : vector<1x512xf32>, i32 -> vector<1x512xf32>
    %15 = vector.extract_strided_slice %2 {offsets = [1, 0], sizes = [1, 512], strides = [1, 1]} : vector<5x512xf32> to vector<1x512xf32>
    %16 = arith.mulf %14, %15 : vector<1x512xf32>
    %17 = vector.broadcast %13 : vector<32x1xf32> to vector<32x512xf32>
    %18 = vector.broadcast %16 : vector<1x512xf32> to vector<32x512xf32>
    %19 = arith.mulf %17, %18 : vector<32x512xf32>
    %20 = arith.addf %12, %19 : vector<32x512xf32>
    %21 = vector.extract_strided_slice %3 {offsets = [0, 2], sizes = [32, 1], strides = [1, 1]} : vector<32x4xf32> to vector<32x1xf32>
    %c15_i32 = arith.constant 15 : i32
    %22 = tpu.dynamic_rotate %1 by %c15_i32 dim 1 : vector<1x512xf32>, i32 -> vector<1x512xf32>
    %23 = vector.extract_strided_slice %2 {offsets = [2, 0], sizes = [1, 512], strides = [1, 1]} : vector<5x512xf32> to vector<1x512xf32>
    %24 = arith.mulf %22, %23 : vector<1x512xf32>
    %25 = vector.broadcast %21 : vector<32x1xf32> to vector<32x512xf32>
    %26 = vector.broadcast %24 : vector<1x512xf32> to vector<32x512xf32>
    %27 = arith.mulf %25, %26 : vector<32x512xf32>
    %28 = arith.addf %20, %27 : vector<32x512xf32>
    %29 = vector.extract_strided_slice %3 {offsets = [0, 3], sizes = [32, 1], strides = [1, 1]} : vector<32x4xf32> to vector<32x1xf32>
    %c1_i32 = arith.constant 1 : i32
    %30 = tpu.dynamic_rotate %1 by %c1_i32 dim 1 : vector<1x512xf32>, i32 -> vector<1x512xf32>
    %31 = vector.extract_strided_slice %2 {offsets = [3, 0], sizes = [1, 512], strides = [1, 1]} : vector<5x512xf32> to vector<1x512xf32>
    %32 = arith.mulf %30, %31 : vector<1x512xf32>
    %33 = vector.broadcast %29 : vector<32x1xf32> to vector<32x512xf32>
    %34 = vector.broadcast %32 : vector<1x512xf32> to vector<32x512xf32>
    %35 = arith.mulf %33, %34 : vector<32x512xf32>
    %36 = arith.addf %28, %35 : vector<32x512xf32>
    %c0_6 = arith.constant 0 : index
    %c0_7 = arith.constant 0 : index
    %37 = vector.load %arg4[%c0_6, %c0_7] : memref<32x1xf32, #tpu.memory_space<vmem>>, vector<32x1xf32>
    %38 = vector.broadcast %37 : vector<32x1xf32> to vector<32x512xf32>
    %39 = arith.addf %36, %38 : vector<32x512xf32>
    %cst_8 = arith.constant 0.000000e+00 : f32
    %40 = vector.broadcast %cst_8 : f32 to vector<32x512xf32>
    %41 = arith.cmpf ogt, %39, %40 : vector<32x512xf32>
    %c0_9 = arith.constant 0 : index
    %c0_10 = arith.constant 0 : index
    %42 = vector.load %arg5[%c0_9, %c0_10] : memref<32x1xf32, #tpu.memory_space<vmem>>, vector<32x1xf32>
    %43 = vector.broadcast %42 : vector<32x1xf32> to vector<32x512xf32>
    %44 = arith.mulf %39, %43 : vector<32x512xf32>
    %45 = arith.select %41, %39, %44 : vector<32x512xi1>, vector<32x512xf32>
    %cst_11 = arith.constant 0.000000e+00 : f32
    %46 = vector.broadcast %cst_11 : f32 to vector<32x512xf32>
    %c0_12 = arith.constant 0 : index
    %c0_13 = arith.constant 0 : index
    %c0_14 = arith.constant 0 : index
    %47 = vector.load %arg6[%c0_12, %c0_13, %c0_14] : memref<5x32x32xf32, #tpu.memory_space<vmem>>, vector<1x32x32xf32>
    %48 = vector.shape_cast %47 : vector<1x32x32xf32> to vector<32x32xf32>
    %c17_i32_15 = arith.constant 17 : i32
    %49 = tpu.dynamic_rotate %45 by %c17_i32_15 dim 1 : vector<32x512xf32>, i32 -> vector<32x512xf32>
    %50 = vector.extract_strided_slice %2 {offsets = [0, 0], sizes = [1, 512], strides = [1, 1]} : vector<5x512xf32> to vector<1x512xf32>
    %51 = vector.broadcast %50 : vector<1x512xf32> to vector<32x512xf32>
    %52 = arith.mulf %49, %51 : vector<32x512xf32>
    %cst_16 = arith.constant dense<0.000000e+00> : vector<32x512xf32>
    %53 = tpu.matmul %48, %52, %cst_16 {dimension_numbers = #tpu.dot_dimension_numbers<[1], [0], [0], [1], [0, 0, 1, 1], [], []>} : vector<32x32xf32>, vector<32x512xf32>, vector<32x512xf32> -> vector<32x512xf32>
    %54 = arith.addf %46, %53 : vector<32x512xf32>
    %c1 = arith.constant 1 : index
    %c0_17 = arith.constant 0 : index
    %c0_18 = arith.constant 0 : index
    %55 = vector.load %arg6[%c1, %c0_17, %c0_18] : memref<5x32x32xf32, #tpu.memory_space<vmem>>, vector<1x32x32xf32>
    %56 = vector.shape_cast %55 : vector<1x32x32xf32> to vector<32x32xf32>
    %c16_i32_19 = arith.constant 16 : i32
    %57 = tpu.dynamic_rotate %45 by %c16_i32_19 dim 1 : vector<32x512xf32>, i32 -> vector<32x512xf32>
    %58 = vector.extract_strided_slice %2 {offsets = [1, 0], sizes = [1, 512], strides = [1, 1]} : vector<5x512xf32> to vector<1x512xf32>
    %59 = vector.broadcast %58 : vector<1x512xf32> to vector<32x512xf32>
    %60 = arith.mulf %57, %59 : vector<32x512xf32>
    %cst_20 = arith.constant dense<0.000000e+00> : vector<32x512xf32>
    %61 = tpu.matmul %56, %60, %cst_20 {dimension_numbers = #tpu.dot_dimension_numbers<[1], [0], [0], [1], [0, 0, 1, 1], [], []>} : vector<32x32xf32>, vector<32x512xf32>, vector<32x512xf32> -> vector<32x512xf32>
    %62 = arith.addf %54, %61 : vector<32x512xf32>
    %c2 = arith.constant 2 : index
    %c0_21 = arith.constant 0 : index
    %c0_22 = arith.constant 0 : index
    %63 = vector.load %arg6[%c2, %c0_21, %c0_22] : memref<5x32x32xf32, #tpu.memory_space<vmem>>, vector<1x32x32xf32>
    %64 = vector.shape_cast %63 : vector<1x32x32xf32> to vector<32x32xf32>
    %c15_i32_23 = arith.constant 15 : i32
    %65 = tpu.dynamic_rotate %45 by %c15_i32_23 dim 1 : vector<32x512xf32>, i32 -> vector<32x512xf32>
    %66 = vector.extract_strided_slice %2 {offsets = [2, 0], sizes = [1, 512], strides = [1, 1]} : vector<5x512xf32> to vector<1x512xf32>
    %67 = vector.broadcast %66 : vector<1x512xf32> to vector<32x512xf32>
    %68 = arith.mulf %65, %67 : vector<32x512xf32>
    %cst_24 = arith.constant dense<0.000000e+00> : vector<32x512xf32>
    %69 = tpu.matmul %64, %68, %cst_24 {dimension_numbers = #tpu.dot_dimension_numbers<[1], [0], [0], [1], [0, 0, 1, 1], [], []>} : vector<32x32xf32>, vector<32x512xf32>, vector<32x512xf32> -> vector<32x512xf32>
    %70 = arith.addf %62, %69 : vector<32x512xf32>
    %c3 = arith.constant 3 : index
    %c0_25 = arith.constant 0 : index
    %c0_26 = arith.constant 0 : index
    %71 = vector.load %arg6[%c3, %c0_25, %c0_26] : memref<5x32x32xf32, #tpu.memory_space<vmem>>, vector<1x32x32xf32>
    %72 = vector.shape_cast %71 : vector<1x32x32xf32> to vector<32x32xf32>
    %c1_i32_27 = arith.constant 1 : i32
    %73 = tpu.dynamic_rotate %45 by %c1_i32_27 dim 1 : vector<32x512xf32>, i32 -> vector<32x512xf32>
    %74 = vector.extract_strided_slice %2 {offsets = [3, 0], sizes = [1, 512], strides = [1, 1]} : vector<5x512xf32> to vector<1x512xf32>
    %75 = vector.broadcast %74 : vector<1x512xf32> to vector<32x512xf32>
    %76 = arith.mulf %73, %75 : vector<32x512xf32>
    %cst_28 = arith.constant dense<0.000000e+00> : vector<32x512xf32>
    %77 = tpu.matmul %72, %76, %cst_28 {dimension_numbers = #tpu.dot_dimension_numbers<[1], [0], [0], [1], [0, 0, 1, 1], [], []>} : vector<32x32xf32>, vector<32x512xf32>, vector<32x512xf32> -> vector<32x512xf32>
    %78 = arith.addf %70, %77 : vector<32x512xf32>
    %c4 = arith.constant 4 : index
    %c0_29 = arith.constant 0 : index
    %c0_30 = arith.constant 0 : index
    %79 = vector.load %arg6[%c4, %c0_29, %c0_30] : memref<5x32x32xf32, #tpu.memory_space<vmem>>, vector<1x32x32xf32>
    %80 = vector.shape_cast %79 : vector<1x32x32xf32> to vector<32x32xf32>
    %81 = vector.extract_strided_slice %2 {offsets = [4, 0], sizes = [1, 512], strides = [1, 1]} : vector<5x512xf32> to vector<1x512xf32>
    %82 = vector.broadcast %81 : vector<1x512xf32> to vector<32x512xf32>
    %83 = arith.mulf %45, %82 : vector<32x512xf32>
    %cst_31 = arith.constant dense<0.000000e+00> : vector<32x512xf32>
    %84 = tpu.matmul %80, %83, %cst_31 {dimension_numbers = #tpu.dot_dimension_numbers<[1], [0], [0], [1], [0, 0, 1, 1], [], []>} : vector<32x32xf32>, vector<32x512xf32>, vector<32x512xf32> -> vector<32x512xf32>
    %85 = arith.addf %78, %84 : vector<32x512xf32>
    %c0_32 = arith.constant 0 : index
    %c0_33 = arith.constant 0 : index
    %86 = vector.load %arg7[%c0_32, %c0_33] : memref<32x1xf32, #tpu.memory_space<vmem>>, vector<32x1xf32>
    %87 = vector.broadcast %86 : vector<32x1xf32> to vector<32x512xf32>
    %88 = arith.addf %85, %87 : vector<32x512xf32>
    %cst_34 = arith.constant 0.000000e+00 : f32
    %89 = vector.broadcast %cst_34 : f32 to vector<32x512xf32>
    %90 = arith.cmpf ogt, %88, %89 : vector<32x512xf32>
    %c0_35 = arith.constant 0 : index
    %c0_36 = arith.constant 0 : index
    %91 = vector.load %arg8[%c0_35, %c0_36] : memref<32x1xf32, #tpu.memory_space<vmem>>, vector<32x1xf32>
    %92 = vector.broadcast %91 : vector<32x1xf32> to vector<32x512xf32>
    %93 = arith.mulf %88, %92 : vector<32x512xf32>
    %94 = arith.select %90, %88, %93 : vector<32x512xi1>, vector<32x512xf32>
    %c0_37 = arith.constant 0 : index
    %c0_38 = arith.constant 0 : index
    %95 = vector.load %arg9[%c0_37, %c0_38] : memref<32x5xf32, #tpu.memory_space<vmem>>, vector<32x5xf32>
    %cst_39 = arith.constant 0.000000e+00 : f32
    %96 = vector.broadcast %cst_39 : f32 to vector<32x512xf32>
    %97 = vector.extract_strided_slice %95 {offsets = [0, 0], sizes = [32, 1], strides = [1, 1]} : vector<32x5xf32> to vector<32x1xf32>
    %c17_i32_40 = arith.constant 17 : i32
    %98 = tpu.dynamic_rotate %94 by %c17_i32_40 dim 1 : vector<32x512xf32>, i32 -> vector<32x512xf32>
    %99 = vector.extract_strided_slice %2 {offsets = [0, 0], sizes = [1, 512], strides = [1, 1]} : vector<5x512xf32> to vector<1x512xf32>
    %100 = vector.broadcast %99 : vector<1x512xf32> to vector<32x512xf32>
    %101 = arith.mulf %98, %100 : vector<32x512xf32>
    %102 = vector.broadcast %97 : vector<32x1xf32> to vector<32x512xf32>
    %103 = arith.mulf %102, %101 : vector<32x512xf32>
    %104 = arith.addf %96, %103 : vector<32x512xf32>
    %105 = vector.extract_strided_slice %95 {offsets = [0, 1], sizes = [32, 1], strides = [1, 1]} : vector<32x5xf32> to vector<32x1xf32>
    %c16_i32_41 = arith.constant 16 : i32
    %106 = tpu.dynamic_rotate %94 by %c16_i32_41 dim 1 : vector<32x512xf32>, i32 -> vector<32x512xf32>
    %107 = vector.extract_strided_slice %2 {offsets = [1, 0], sizes = [1, 512], strides = [1, 1]} : vector<5x512xf32> to vector<1x512xf32>
    %108 = vector.broadcast %107 : vector<1x512xf32> to vector<32x512xf32>
    %109 = arith.mulf %106, %108 : vector<32x512xf32>
    %110 = vector.broadcast %105 : vector<32x1xf32> to vector<32x512xf32>
    %111 = arith.mulf %110, %109 : vector<32x512xf32>
    %112 = arith.addf %104, %111 : vector<32x512xf32>
    %113 = vector.extract_strided_slice %95 {offsets = [0, 2], sizes = [32, 1], strides = [1, 1]} : vector<32x5xf32> to vector<32x1xf32>
    %c15_i32_42 = arith.constant 15 : i32
    %114 = tpu.dynamic_rotate %94 by %c15_i32_42 dim 1 : vector<32x512xf32>, i32 -> vector<32x512xf32>
    %115 = vector.extract_strided_slice %2 {offsets = [2, 0], sizes = [1, 512], strides = [1, 1]} : vector<5x512xf32> to vector<1x512xf32>
    %116 = vector.broadcast %115 : vector<1x512xf32> to vector<32x512xf32>
    %117 = arith.mulf %114, %116 : vector<32x512xf32>
    %118 = vector.broadcast %113 : vector<32x1xf32> to vector<32x512xf32>
    %119 = arith.mulf %118, %117 : vector<32x512xf32>
    %120 = arith.addf %112, %119 : vector<32x512xf32>
    %121 = vector.extract_strided_slice %95 {offsets = [0, 3], sizes = [32, 1], strides = [1, 1]} : vector<32x5xf32> to vector<32x1xf32>
    %c1_i32_43 = arith.constant 1 : i32
    %122 = tpu.dynamic_rotate %94 by %c1_i32_43 dim 1 : vector<32x512xf32>, i32 -> vector<32x512xf32>
    %123 = vector.extract_strided_slice %2 {offsets = [3, 0], sizes = [1, 512], strides = [1, 1]} : vector<5x512xf32> to vector<1x512xf32>
    %124 = vector.broadcast %123 : vector<1x512xf32> to vector<32x512xf32>
    %125 = arith.mulf %122, %124 : vector<32x512xf32>
    %126 = vector.broadcast %121 : vector<32x1xf32> to vector<32x512xf32>
    %127 = arith.mulf %126, %125 : vector<32x512xf32>
    %128 = arith.addf %120, %127 : vector<32x512xf32>
    %129 = vector.extract_strided_slice %95 {offsets = [0, 4], sizes = [32, 1], strides = [1, 1]} : vector<32x5xf32> to vector<32x1xf32>
    %130 = vector.extract_strided_slice %2 {offsets = [4, 0], sizes = [1, 512], strides = [1, 1]} : vector<5x512xf32> to vector<1x512xf32>
    %131 = vector.broadcast %130 : vector<1x512xf32> to vector<32x512xf32>
    %132 = arith.mulf %94, %131 : vector<32x512xf32>
    %133 = vector.broadcast %129 : vector<32x1xf32> to vector<32x512xf32>
    %134 = arith.mulf %133, %132 : vector<32x512xf32>
    %135 = arith.addf %128, %134 : vector<32x512xf32>
    %cst_44 = arith.constant dense<0.000000e+00> : vector<512xf32>
    %136 = vector.multi_reduction <add>, %135, %cst_44 [0] : vector<32x512xf32> to vector<512xf32>
    %137 = vector.shape_cast %136 : vector<512xf32> to vector<1x512xf32>
    %c0_45 = arith.constant 0 : index
    %c0_46 = arith.constant 0 : index
    %138 = vector.load %arg10[%c0_45, %c0_46] : memref<1x1xf32, #tpu.memory_space<vmem>>, vector<1x1xf32>
    %139 = vector.broadcast %138 : vector<1x1xf32> to vector<1x512xf32>
    %140 = arith.addf %137, %139 : vector<1x512xf32>
    %cst_47 = arith.constant 0.000000e+00 : f32
    %141 = vector.broadcast %cst_47 : f32 to vector<1x512xf32>
    %142 = arith.subf %141, %140 : vector<1x512xf32>
    %143 = math.exp %142 : vector<1x512xf32>
    %cst_48 = arith.constant 1.000000e+00 : f32
    %144 = vector.broadcast %cst_48 : f32 to vector<1x512xf32>
    %145 = arith.addf %144, %143 : vector<1x512xf32>
    %146 = tpu.reciprocal %145 {approx = true} : vector<1x512xf32> -> vector<1x512xf32>
    %c0_49 = arith.constant 0 : index
    %c0_50 = arith.constant 0 : index
    %147 = vector.load %arg11[%c0_49, %c0_50] : memref<1x512xf32, #tpu.memory_space<vmem>>, vector<1x512xf32>
    %148 = arith.mulf %146, %147 : vector<1x512xf32>
    %c0_51 = arith.constant 0 : index
    %c0_52 = arith.constant 0 : index
    %149 = vector.load %arg12[%c0_51, %c0_52] : memref<1x512xf32, #tpu.memory_space<vmem>>, vector<1x512xf32>
    %150 = arith.addf %148, %149 : vector<1x512xf32>
    %c0_53 = arith.constant 0 : index
    %c0_54 = arith.constant 0 : index
    %c0_55 = arith.constant 0 : index
    %151 = vector.load %arg13[%c0_53, %c0_54, %c0_55] : memref<1x1x512xf32, #tpu.memory_space<vmem>>, vector<1x1x512xf32>
    %152 = vector.shape_cast %151 : vector<1x1x512xf32> to vector<1x512xf32>
    %153 = vector.shape_cast %150 : vector<1x512xf32> to vector<1x1x512xf32>
    tpu.vector_store %arg13[%c0_53, %c0_54, %c0_55], %153 {strides = array<i32>} : memref<1x1x512xf32, #tpu.memory_space<vmem>>, vector<1x1x512xf32>,
    return
  }
  func.func @transform_0(%arg0: i32) -> (i32, i32, i32) {
    %c0_i32 = arith.constant 0 : i32
    %c0_i32_0 = arith.constant 0 : i32
    %c0_i32_1 = arith.constant 0 : i32
    return %arg0, %c0_i32, %c0_i32_0 : i32, i32, i32
  }
  func.func @transform_1(%arg0: i32) -> (i32, i32) {
    %c0_i32 = arith.constant 0 : i32
    %c0_i32_0 = arith.constant 0 : i32
    %c0_i32_1 = arith.constant 0 : i32
    return %c0_i32, %c0_i32_0 : i32, i32
  }
  func.func @transform_2(%arg0: i32) -> (i32, i32) {
    %c0_i32 = arith.constant 0 : i32
    %c0_i32_0 = arith.constant 0 : i32
    %c0_i32_1 = arith.constant 0 : i32
    return %c0_i32, %c0_i32_0 : i32, i32
  }
  func.func @transform_3(%arg0: i32) -> (i32, i32) {
    %c0_i32 = arith.constant 0 : i32
    %c0_i32_0 = arith.constant 0 : i32
    %c0_i32_1 = arith.constant 0 : i32
    return %c0_i32, %c0_i32_0 : i32, i32
  }
  func.func @transform_4(%arg0: i32) -> (i32, i32) {
    %c0_i32 = arith.constant 0 : i32
    %c0_i32_0 = arith.constant 0 : i32
    %c0_i32_1 = arith.constant 0 : i32
    return %c0_i32, %c0_i32_0 : i32, i32
  }
  func.func @transform_5(%arg0: i32) -> (i32, i32, i32) {
    %c0_i32 = arith.constant 0 : i32
    %c0_i32_0 = arith.constant 0 : i32
    %c0_i32_1 = arith.constant 0 : i32
    %c0_i32_2 = arith.constant 0 : i32
    return %c0_i32, %c0_i32_0, %c0_i32_1 : i32, i32, i32
  }
  func.func @transform_6(%arg0: i32) -> (i32, i32) {
    %c0_i32 = arith.constant 0 : i32
    %c0_i32_0 = arith.constant 0 : i32
    %c0_i32_1 = arith.constant 0 : i32
    return %c0_i32, %c0_i32_0 : i32, i32
  }
  func.func @transform_7(%arg0: i32) -> (i32, i32) {
    %c0_i32 = arith.constant 0 : i32
    %c0_i32_0 = arith.constant 0 : i32
    %c0_i32_1 = arith.constant 0 : i32
    return %c0_i32, %c0_i32_0 : i32, i32
  }
  func.func @transform_8(%arg0: i32) -> (i32, i32) {
    %c0_i32 = arith.constant 0 : i32
    %c0_i32_0 = arith.constant 0 : i32
    %c0_i32_1 = arith.constant 0 : i32
    return %c0_i32, %c0_i32_0 : i32, i32
  }
  func.func @transform_9(%arg0: i32) -> (i32, i32) {
    %c0_i32 = arith.constant 0 : i32
    %c0_i32_0 = arith.constant 0 : i32
    %c0_i32_1 = arith.constant 0 : i32
    return %c0_i32, %c0_i32_0 : i32, i32
  }
  func.func @transform_10(%arg0: i32) -> (i32, i32) {
    %c0_i32 = arith.constant 0 : i32
    %c0_i32_0 = arith.constant 0 : i32
    %c0_i32_1 = arith.constant 0 : i32
    return %c0_i32, %c0_i32_0 : i32, i32
  }
  func.func @transform_11(%arg0: i32) -> (i32, i32) {
    %c0_i32 = arith.constant 0 : i32
    %c0_i32_0 = arith.constant 0 : i32
    %c0_i32_1 = arith.constant 0 : i32
    return %c0_i32, %c0_i32_0 : i32, i32
  }
  func.func @transform_12(%arg0: i32) -> (i32, i32, i32) {
    %c0_i32 = arith.constant 0 : i32
    %c0_i32_0 = arith.constant 0 : i32
    %c0_i32_1 = arith.constant 0 : i32
    return %arg0, %c0_i32, %c0_i32_0 : i32, i32, i32
  }
}

</mosaic_0001>

<llo_original>
// kernel: forward.1
$region0: #{forward.1}
  #allocation0 [shape = 'u32[]', space=smem, size = 0x4, offset = 0x4, fixed_abs, tag = 'smem constant byte address 0x4 - core index']
  #allocation1 [shape = 'u32[72,128]{1,0:T(1,128)}', space=vmem, size = 0x9000, scoped, tag = 'internal scratch']
  #allocation2 [shape = 'f32[1,1]{1,0:T(1,128)S(1)}', space=vmem, size = 0x200, scoped, tag = 'scoped memory for forward.1']
  %s0 = inlined_call_operand.vmem [shape: f32[2,1,512], index: 0, kind: input, shape index: {}]
  %s1 = inlined_call_operand.vmem [shape: f32[5,512], index: 1, kind: input, shape index: {}]
  %s2 = inlined_call_operand.vmem [shape: f32[32,4], index: 2, kind: input, shape index: {}]
  %s3 = inlined_call_operand.vmem [shape: f32[32,1], index: 3, kind: input, shape index: {}]
  %s4 = inlined_call_operand.vmem [shape: f32[32,1], index: 4, kind: input, shape index: {}]
  %s5 = inlined_call_operand.vmem [shape: f32[5,32,32], index: 5, kind: input, shape index: {}]
  %s6 = inlined_call_operand.vmem [shape: f32[32,1], index: 6, kind: input, shape index: {}]
  %s7 = inlined_call_operand.vmem [shape: f32[32,1], index: 7, kind: input, shape index: {}]
  %s8 = inlined_call_operand.vmem [shape: f32[32,5], index: 8, kind: input, shape index: {}]
  %s9 = inlined_call_operand.<no memory space> [shape: f32[1,1], index: 9, kind: input, shape index: {}]
  %s10 = inlined_call_operand.vmem [shape: f32[1,512], index: 10, kind: input, shape index: {}]
  %s11 = inlined_call_operand.vmem [shape: f32[1,512], index: 11, kind: input, shape index: {}]
  %s12 = inlined_call_operand.vmem [shape: f32[2,1,512], index: 12, kind: output, shape index: {}]
  %s13 = sld [smem:[#allocation0]]
  $region81: #{forward.1} parent=0
    _
  %s15 = ssub.s32 1, %s13
  %s16 = scalar_select 0, %s15, %s13
  %v17 = vstv %s9
  %18 = vst [vmem:[#allocation2] sm:$0x1] %v17
  loop: start=0, step=1, limit=4
  $region2: #{forward.1} parent=0 // loop_pre_header
    _
  $region3: #{forward.1} parent=0 // loop_header
    %s20 = sphi 0, %s24
    %p21 = scmp.ge.s32.totalorder %s20, 4
    %s30 = sphi 0, %s32
    %s33 = sphi 0, %s30
    %s34 = sphi 0, %s33
    %s50 = sphi 0, %s34
    %s54 = sphi 0, %s54
    %s56 = sphi 0, %s54
    %s57 = sphi 0, %s56
    %s71 = sphi 0, %s57
    %s75 = sphi 0, %s75
    %s77 = sphi 0, %s75
    %s78 = sphi 0, %s77
    %s92 = sphi 0, %s78
    %s96 = sphi 0, %s96
    %s98 = sphi 0, %s96
    %s99 = sphi 0, %s98
    %s113 = sphi 0, %s99
    %s117 = sphi 0, %s117
    %s119 = sphi 0, %s117
    %s120 = sphi 0, %s119
    %s134 = sphi 0, %s120
    %s138 = sphi 0, %s138
    %s140 = sphi 0, %s138
    %s141 = sphi 0, %s140
    %s155 = sphi 0, %s141
    %s159 = sphi 0, %s159
    %s161 = sphi 0, %s159
    %s162 = sphi 0, %s161
    %s176 = sphi 0, %s162
    %s180 = sphi 0, %s180
    %s182 = sphi 0, %s180
    %s183 = sphi 0, %s182
    %s197 = sphi 0, %s183
    %s201 = sphi 0, %s201
    %s203 = sphi 0, %s201
    %s204 = sphi 0, %s203
    %s218 = sphi 0, %s204
    %s222 = sphi 0, %s222
    %s224 = sphi 0, %s222
    %s225 = sphi 0, %s224
    %s239 = sphi 0, %s225
    %s243 = sphi 0, %s243
    %s245 = sphi 0, %s243
    %s246 = sphi 0, %s245
    %s260 = sphi 0, %s246
    %s264 = sphi 0, %s264
    %s266 = sphi 0, %s264
    %s267 = sphi 0, %s266
    %s281 = sphi 0, %s267
    %s287 = sphi 0, %s289
    %s290 = sphi 0, %s287
    %s291 = sphi 0, %s290
    %s307 = sphi 0, %s291
  $region4: #{forward.1} parent=0 // loop_header_branch
    %23 = sbr.rel (%p21) target = $region8
  $region5: #{forward.1} parent=0 // loop_body
    %s25 = ssub.s32 %s20, 1
    %s26 = ssub.s32 %s20, 2
    %s27 = sadd.s32 %s20, 1
    %s28 = ssub.s32 %s20, %s27
    %p29 = scmp.eq.s32.totalorder %s28, 0
    %s31 = sadd.s32 %s30, 1
    %s32 = scalar_select %p29, %s30, %s31
    %p35 = pneg %p29
    %p36 = scmp.eq.s32.totalorder %s20, 1
    %p37 = por %p35, %p36
    %p38 = scmp.ne.s32.totalorder %s30, %s33
    %p39 = scmp.eq.s32.totalorder %s20, 0
    %p40 = por %p38, %p39
    %p41 = scmp.ne.s32.totalorder %s30, %s33
    %p42 = scmp.eq.s32.totalorder %s25, 1
    %p43 = por %p41, %p42
    %p44 = scmp.ne.s32.totalorder %s33, %s34
    %p45 = scmp.eq.s32.totalorder %s25, 0
    %p46 = por %p44, %p45
    %p47 = scmp.ne.s32.totalorder %s33, %s34
    %p48 = scmp.eq.s32.totalorder %s26, 1
    %p49 = por %p47, %p48
    %p51 = scmp.ne.s32.totalorder %s34, %s50
    %p52 = scmp.eq.s32.totalorder %s26, 0
    %p53 = por %p51, %p52
    %s55 = sadd.s32 %s54, 1
    %p58 = scmp.eq.s32.totalorder %s20, 1
    %p59 = scmp.ne.s32.totalorder %s54, %s56
    %p60 = scmp.eq.s32.totalorder %s20, 0
    %p61 = por %p59, %p60
    %p62 = scmp.ne.s32.totalorder %s54, %s56
    %p63 = scmp.eq.s32.totalorder %s25, 1
    %p64 = por %p62, %p63
    %p65 = scmp.ne.s32.totalorder %s56, %s57
    %p66 = scmp.eq.s32.totalorder %s25, 0
    %p67 = por %p65, %p66
    %p68 = scmp.ne.s32.totalorder %s56, %s57
    %p69 = scmp.eq.s32.totalorder %s26, 1
    %p70 = por %p68, %p69
    %p72 = scmp.ne.s32.totalorder %s57, %s71
    %p73 = scmp.eq.s32.totalorder %s26, 0
    %p74 = por %p72, %p73
    %s76 = sadd.s32 %s75, 1
    %p79 = scmp.eq.s32.totalorder %s20, 1
    %p80 = scmp.ne.s32.totalorder %s75, %s77
    %p81 = scmp.eq.s32.totalorder %s20, 0
    %p82 = por %p80, %p81
    %p83 = scmp.ne.s32.totalorder %s75, %s77
    %p84 = scmp.eq.s32.totalorder %s25, 1
    %p85 = por %p83, %p84
    %p86 = scmp.ne.s32.totalorder %s77, %s78
    %p87 = scmp.eq.s32.totalorder %s25, 0
    %p88 = por %p86, %p87
    %p89 = scmp.ne.s32.totalorder %s77, %s78
    %p90 = scmp.eq.s32.totalorder %s26, 1
    %p91 = por %p89, %p90
    %p93 = scmp.ne.s32.totalorder %s78, %s92
    %p94 = scmp.eq.s32.totalorder %s26, 0
    %p95 = por %p93, %p94
    %s97 = sadd.s32 %s96, 1
    %p100 = scmp.eq.s32.totalorder %s20, 1
    %p101 = scmp.ne.s32.totalorder %s96, %s98
    %p102 = scmp.eq.s32.totalorder %s20, 0
    %p103 = por %p101, %p102
    %p104 = scmp.ne.s32.totalorder %s96, %s98
    %p105 = scmp.eq.s32.totalorder %s25, 1
    %p106 = por %p104, %p105
    %p107 = scmp.ne.s32.totalorder %s98, %s99
    %p108 = scmp.eq.s32.totalorder %s25, 0
    %p109 = por %p107, %p108
    %p110 = scmp.ne.s32.totalorder %s98, %s99
    %p111 = scmp.eq.s32.totalorder %s26, 1
    %p112 = por %p110, %p111
    %p114 = scmp.ne.s32.totalorder %s99, %s113
    %p115 = scmp.eq.s32.totalorder %s26, 0
    %p116 = por %p114, %p115
    %s118 = sadd.s32 %s117, 1
    %p121 = scmp.eq.s32.totalorder %s20, 1
    %p122 = scmp.ne.s32.totalorder %s117, %s119
    %p123 = scmp.eq.s32.totalorder %s20, 0
    %p124 = por %p122, %p123
    %p125 = scmp.ne.s32.totalorder %s117, %s119
    %p126 = scmp.eq.s32.totalorder %s25, 1
    %p127 = por %p125, %p126
    %p128 = scmp.ne.s32.totalorder %s119, %s120
    %p129 = scmp.eq.s32.totalorder %s25, 0
    %p130 = por %p128, %p129
    %p131 = scmp.ne.s32.totalorder %s119, %s120
    %p132 = scmp.eq.s32.totalorder %s26, 1
    %p133 = por %p131, %p132
    %p135 = scmp.ne.s32.totalorder %s120, %s134
    %p136 = scmp.eq.s32.totalorder %s26, 0
    %p137 = por %p135, %p136
    %s139 = sadd.s32 %s138, 1
    %p142 = scmp.eq.s32.totalorder %s20, 1
    %p143 = scmp.ne.s32.totalorder %s138, %s140
    %p144 = scmp.eq.s32.totalorder %s20, 0
    %p145 = por %p143, %p144
    %p146 = scmp.ne.s32.totalorder %s138, %s140
    %p147 = scmp.eq.s32.totalorder %s25, 1
    %p148 = por %p146, %p147
    %p149 = scmp.ne.s32.totalorder %s140, %s141
    %p150 = scmp.eq.s32.totalorder %s25, 0
    %p151 = por %p149, %p150
    %p152 = scmp.ne.s32.totalorder %s140, %s141
    %p153 = scmp.eq.s32.totalorder %s26, 1
    %p154 = por %p152, %p153
    %p156 = scmp.ne.s32.totalorder %s141, %s155
    %p157 = scmp.eq.s32.totalorder %s26, 0
    %p158 = por %p156, %p157
    %s160 = sadd.s32 %s159, 1
    %p163 = scmp.eq.s32.totalorder %s20, 1
    %p164 = scmp.ne.s32.totalorder %s159, %s161
    %p165 = scmp.eq.s32.totalorder %s20, 0
    %p166 = por %p164, %p165
    %p167 = scmp.ne.s32.totalorder %s159, %s161
    %p168 = scmp.eq.s32.totalorder %s25, 1
    %p169 = por %p167, %p168
    %p170 = scmp.ne.s32.totalorder %s161, %s162
    %p171 = scmp.eq.s32.totalorder %s25, 0
    %p172 = por %p170, %p171
    %p173 = scmp.ne.s32.totalorder %s161, %s162
    %p174 = scmp.eq.s32.totalorder %s26, 1
    %p175 = por %p173, %p174
    %p177 = scmp.ne.s32.totalorder %s162, %s176
    %p178 = scmp.eq.s32.totalorder %s26, 0
    %p179 = por %p177, %p178
    %s181 = sadd.s32 %s180, 1
    %p184 = scmp.eq.s32.totalorder %s20, 1
    %p185 = scmp.ne.s32.totalorder %s180, %s182
    %p186 = scmp.eq.s32.totalorder %s20, 0
    %p187 = por %p185, %p186
    %p188 = scmp.ne.s32.totalorder %s180, %s182
    %p189 = scmp.eq.s32.totalorder %s25, 1
    %p190 = por %p188, %p189
    %p191 = scmp.ne.s32.totalorder %s182, %s183
    %p192 = scmp.eq.s32.totalorder %s25, 0
    %p193 = por %p191, %p192
    %p194 = scmp.ne.s32.totalorder %s182, %s183
    %p195 = scmp.eq.s32.totalorder %s26, 1
    %p196 = por %p194, %p195
    %p198 = scmp.ne.s32.totalorder %s183, %s197
    %p199 = scmp.eq.s32.totalorder %s26, 0
    %p200 = por %p198, %p199
    %s202 = sadd.s32 %s201, 1
    %p205 = scmp.eq.s32.totalorder %s20, 1
    %p206 = scmp.ne.s32.totalorder %s201, %s203
    %p207 = scmp.eq.s32.totalorder %s20, 0
    %p208 = por %p206, %p207
    %p209 = scmp.ne.s32.totalorder %s201, %s203
    %p210 = scmp.eq.s32.totalorder %s25, 1
    %p211 = por %p209, %p210
    %p212 = scmp.ne.s32.totalorder %s203, %s204
    %p213 = scmp.eq.s32.totalorder %s25, 0
    %p214 = por %p212, %p213
    %p215 = scmp.ne.s32.totalorder %s203, %s204
    %p216 = scmp.eq.s32.totalorder %s26, 1
    %p217 = por %p215, %p216
    %p219 = scmp.ne.s32.totalorder %s204, %s218
    %p220 = scmp.eq.s32.totalorder %s26, 0
    %p221 = por %p219, %p220
    %s223 = sadd.s32 %s222, 1
    %p226 = scmp.eq.s32.totalorder %s20, 1
    %p227 = scmp.ne.s32.totalorder %s222, %s224
    %p228 = scmp.eq.s32.totalorder %s20, 0
    %p229 = por %p227, %p228
    %p230 = scmp.ne.s32.totalorder %s222, %s224
    %p231 = scmp.eq.s32.totalorder %s25, 1
    %p232 = por %p230, %p231
    %p233 = scmp.ne.s32.totalorder %s224, %s225
    %p234 = scmp.eq.s32.totalorder %s25, 0
    %p235 = por %p233, %p234
    %p236 = scmp.ne.s32.totalorder %s224, %s225
    %p237 = scmp.eq.s32.totalorder %s26, 1
    %p238 = por %p236, %p237
    %p240 = scmp.ne.s32.totalorder %s225, %s239
    %p241 = scmp.eq.s32.totalorder %s26, 0
    %p242 = por %p240, %p241
    %s244 = sadd.s32 %s243, 1
    %p247 = scmp.eq.s32.totalorder %s20, 1
    %p248 = scmp.ne.s32.totalorder %s243, %s245
    %p249 = scmp.eq.s32.totalorder %s20, 0
    %p250 = por %p248, %p249
    %p251 = scmp.ne.s32.totalorder %s243, %s245
    %p252 = scmp.eq.s32.totalorder %s25, 1
    %p253 = por %p251, %p252
    %p254 = scmp.ne.s32.totalorder %s245, %s246
    %p255 = scmp.eq.s32.totalorder %s25, 0
    %p256 = por %p254, %p255
    %p257 = scmp.ne.s32.totalorder %s245, %s246
    %p258 = scmp.eq.s32.totalorder %s26, 1
    %p259 = por %p257, %p258
    %p261 = scmp.ne.s32.totalorder %s246, %s260
    %p262 = scmp.eq.s32.totalorder %s26, 0
    %p263 = por %p261, %p262
    %s265 = sadd.s32 %s264, 1
    %p268 = scmp.eq.s32.totalorder %s20, 1
    %p269 = scmp.ne.s32.totalorder %s264, %s266
    %p270 = scmp.eq.s32.totalorder %s20, 0
    %p271 = por %p269, %p270
    %p272 = scmp.ne.s32.totalorder %s264, %s266
    %p273 = scmp.eq.s32.totalorder %s25, 1
    %p274 = por %p272, %p273
    %p275 = scmp.ne.s32.totalorder %s266, %s267
    %p276 = scmp.eq.s32.totalorder %s25, 0
    %p277 = por %p275, %p276
    %p278 = scmp.ne.s32.totalorder %s266, %s267
    %p279 = scmp.eq.s32.totalorder %s26, 1
    %p280 = por %p278, %p279
    %p282 = scmp.ne.s32.totalorder %s267, %s281
    %p283 = scmp.eq.s32.totalorder %s26, 0
    %p284 = por %p282, %p283
    %s285 = ssub.s32 %s20, %s27
    %p286 = scmp.eq.s32.totalorder %s285, 0
    %s288 = sadd.s32 %s287, 1
    %s289 = scalar_select %p286, %s287, %s288
    %p292 = pneg %p286
    %p293 = scmp.eq.s32.totalorder %s20, 1
    %p294 = por %p292, %p293
    %p295 = scmp.ne.s32.totalorder %s287, %s290
    %p296 = scmp.eq.s32.totalorder %s20, 0
    %p297 = por %p295, %p296
    %p298 = scmp.ne.s32.totalorder %s287, %s290
    %p299 = scmp.eq.s32.totalorder %s25, 1
    %p300 = por %p298, %p299
    %p301 = scmp.ne.s32.totalorder %s290, %s291
    %p302 = scmp.eq.s32.totalorder %s25, 0
    %p303 = por %p301, %p302
    %p304 = scmp.ne.s32.totalorder %s290, %s291
    %p305 = scmp.eq.s32.totalorder %s26, 1
    %p306 = por %p304, %p305
    %p308 = scmp.ne.s32.totalorder %s291, %s307
    %p309 = scmp.eq.s32.totalorder %s26, 0
    %p310 = por %p308, %p309
    %p311 = scmp.le.s32.totalorder 1, %s20
    %p312 = scmp.lt.s32.totalorder %s20, 3
    %p313 = pnand %p311, %p312
    %p314 = pneg %p313
    // Predicated region
    $region9: #{forward.1} parent=5 // pred_check
      _
    $region10: #{forward.1} parent=5 // pred_check_branch
      %316 = sbr.rel (%p313) target = $region12
    $region11: #{forward.1} parent=5 // pred_region
      %s317 = ssub.s32 %s20, 1
      // Predicated region
      $region13: #{forward.1} parent=11 // pred_check
        %p318 = pneg %p67
      $region14: #{forward.1} parent=11 // pred_check_branch
        %320 = sbr.rel (%p318) target = $region16
      $region15: #{forward.1} parent=11 // pred_region
        _
      $region16: #{forward.1} parent=11 // pred_fallthru
        _
      // Predicated region
      $region17: #{forward.1} parent=11 // pred_check
        %p321 = pneg %p88
      $region18: #{forward.1} parent=11 // pred_check_branch
        %323 = sbr.rel (%p321) target = $region20
      $region19: #{forward.1} parent=11 // pred_region
        _
      $region20: #{forward.1} parent=11 // pred_fallthru
        _
      // Predicated region
      $region21: #{forward.1} parent=11 // pred_check
        %p324 = pneg %p109
      $region22: #{forward.1} parent=11 // pred_check_branch
        %326 = sbr.rel (%p324) target = $region24
      $region23: #{forward.1} parent=11 // pred_region
        _
      $region24: #{forward.1} parent=11 // pred_fallthru
        _
      // Predicated region
      $region25: #{forward.1} parent=11 // pred_check
        %p327 = pneg %p130
      $region26: #{forward.1} parent=11 // pred_check_branch
        %329 = sbr.rel (%p327) target = $region28
      $region27: #{forward.1} parent=11 // pred_region
        _
      $region28: #{forward.1} parent=11 // pred_fallthru
        _
      // Predicated region
      $region29: #{forward.1} parent=11 // pred_check
        %p330 = pneg %p151
      $region30: #{forward.1} parent=11 // pred_check_branch
        %332 = sbr.rel (%p330) target = $region32
      $region31: #{forward.1} parent=11 // pred_region
        _
      $region32: #{forward.1} parent=11 // pred_fallthru
        _
      // Predicated region
      $region33: #{forward.1} parent=11 // pred_check
        %p333 = pneg %p172
      $region34: #{forward.1} parent=11 // pred_check_branch
        %335 = sbr.rel (%p333) target = $region36
      $region35: #{forward.1} parent=11 // pred_region
        _
      $region36: #{forward.1} parent=11 // pred_fallthru
        _
      // Predicated region
      $region37: #{forward.1} parent=11 // pred_check
        %p336 = pneg %p193
      $region38: #{forward.1} parent=11 // pred_check_branch
        %338 = sbr.rel (%p336) target = $region40
      $region39: #{forward.1} parent=11 // pred_region
        _
      $region40: #{forward.1} parent=11 // pred_fallthru
        _
      // Predicated region
      $region41: #{forward.1} parent=11 // pred_check
        %p339 = pneg %p214
      $region42: #{forward.1} parent=11 // pred_check_branch
        %341 = sbr.rel (%p339) target = $region44
      $region43: #{forward.1} parent=11 // pred_region
        _
      $region44: #{forward.1} parent=11 // pred_fallthru
        _
      // Predicated region
      $region45: #{forward.1} parent=11 // pred_check
        %p342 = pneg %p235
      $region46: #{forward.1} parent=11 // pred_check_branch
        %344 = sbr.rel (%p342) target = $region48
      $region47: #{forward.1} parent=11 // pred_region
        _
      $region48: #{forward.1} parent=11 // pred_fallthru
        _
      // Predicated region
      $region49: #{forward.1} parent=11 // pred_check
        %p345 = pneg %p256
      $region50: #{forward.1} parent=11 // pred_check_branch
        %347 = sbr.rel (%p345) target = $region52
      $region51: #{forward.1} parent=11 // pred_region
        _
      $region52: #{forward.1} parent=11 // pred_fallthru
        _
      // Predicated region
      $region53: #{forward.1} parent=11 // pred_check
        %p348 = pneg %p277
      $region54: #{forward.1} parent=11 // pred_check_branch
        %350 = sbr.rel (%p348) target = $region56
      $region55: #{forward.1} parent=11 // pred_region
        _
      $region56: #{forward.1} parent=11 // pred_fallthru
        _
    $region12: #{forward.1} parent=5 // pred_fallthru
      _
    %p351 = scmp.lt.s32.totalorder %s20, 2
    // Predicated region
    $region57: #{forward.1} parent=5 // pred_check
      %p352 = pneg %p351
    $region58: #{forward.1} parent=5 // pred_check_branch
      %354 = sbr.rel (%p352) target = $region60
    $region59: #{forward.1} parent=5 // pred_region
      // Predicated region
      $region61: #{forward.1} parent=59 // pred_check
        %p355 = pneg %p40
      $region62: #{forward.1} parent=59 // pred_check_branch
        %357 = sbr.rel (%p355) target = $region64
      $region63: #{forward.1} parent=59 // pred_region
        %p358 = scmp.lt.s32.totalorder %s20, 1
        %s359 = scalar_select %p358, %s20, 1
        %s360 = smul.addr %s359, 4
        %s361 = scalar_lea.vmem %s0, %s360
      $region64: #{forward.1} parent=59 // pred_fallthru
        _
    $region60: #{forward.1} parent=5 // pred_fallthru
      _
    %p362 = scmp.le.s32.totalorder 1, %s20
    %p363 = scmp.lt.s32.totalorder %s20, 3
    %p364 = pnand %p362, %p363
    %p365 = pneg %p364
    // Predicated region
    $region65: #{forward.1} parent=5 // pred_check
      _
    $region66: #{forward.1} parent=5 // pred_check_branch
      %367 = sbr.rel (%p364) target = $region68
    $region67: #{forward.1} parent=5 // pred_region
      %s368 = ssub.s32 %s20, 1
      %p369 = scmp.lt.s32.totalorder %s25, 1
      %s370 = scalar_select %p369, %s25, 1
      %s371 = smul.addr %s370, 4
      %s372 = scalar_lea.vmem %s0, %s371
      %p373 = pneg %p46
      %p374 = pneg %p43
      %p375 = pneg %p67
      %p376 = pneg %p64
      %p377 = pneg %p88
      %p378 = pneg %p85
      %p379 = pneg %p109
      %p380 = pneg %p106
      %p381 = pneg %p130
      %p382 = pneg %p127
      %p383 = pneg %p151
      %p384 = pneg %p148
      %p385 = pneg %p172
      %p386 = pneg %p169
      %p387 = pneg %p193
      %p388 = pneg %p190
      %p389 = pneg %p214
      %p390 = pneg %p211
      %p391 = pneg %p235
      %p392 = pneg %p232
      %p393 = pneg %p256
      %p394 = pneg %p253
      %p395 = pneg %p277
      %p396 = pneg %p274
      %p397 = pneg %p303
      %p398 = pneg %p300
      %p399 = scmp.lt.s32.totalorder %s25, 1
      %s400 = scalar_select %p399, %s25, 1
      %s401 = smul.addr %s400, 4
      %s402 = scalar_lea.vmem %s12, %s401
      %p403 = scmp.lt.s32.totalorder %s25, 1
      %s404 = scalar_select %p403, %s25, 1
      %s405 = smul.addr %s404, 4
      %s406 = scalar_lea.vmem %s0, %s405
      %p407 = scmp.lt.s32.totalorder %s25, 1
      %s408 = scalar_select %p407, %s25, 1
      %s409 = smul.addr %s408, 4
      %s410 = scalar_lea.vmem %s12, %s409
      %v411 = vld [vmem:[%s406] sm:$0xf]
      %v412 = vld [vmem:[%s1] sm:$0x1f]
      %v413 = vld [vmem:[%s1 + $0x8] sm:$0x1f]
      %v414 = vld [vmem:[%s1 + $0x10] sm:$0x1f]
      %v415 = vld [vmem:[%s1 + $0x18] sm:$0x1f]
      %v416 = vld [vmem:[%s2] sm:$0xff]
      %v417 = vld [vmem:[%s2 + $0x8] sm:$0xff]
      %v418 = vld [vmem:[%s2 + $0x10] sm:$0xff]
      %v419 = vld [vmem:[%s2 + $0x18] sm:$0xff]
      %v421 = vperm.slane %v411, 0
      %v422 = vperm.slane %v411, 1
      %v423 = vperm.slane %v411, 2
      %v424 = vperm.slane %v411, 3
      %429 = vrot.lane.b32.xlu0 %v421, 17
      %v430 = vpop.permute.xlu0 %429
      %431 = vrot.lane.b32.xlu0 %v422, 17
      %v432 = vpop.permute.xlu0 %431
      %433 = vrot.lane.b32.xlu0 %v423, 17
      %v434 = vpop.permute.xlu0 %433
      %435 = vrot.lane.b32.xlu0 %v424, 17
      %v436 = vpop.permute.xlu0 %435
      %v437 = vlaneseq
      %v438 = vand.u32 %v437, 127
      %vm439 = vcmp.lt.s32.totalorder %v438, 17
      %v440 = vsel %vm439, %v434, %v436
      %v441 = vsel %vm439, %v432, %v434
      %v442 = vsel %vm439, %v430, %v432
      %v443 = vsel %vm439, %v436, %v430
      %v444 = vmul.f32 %v443, %v412
      %v445 = vmul.f32 %v442, %v413
      %v446 = vmul.f32 %v441, %v414
      %v447 = vmul.f32 %v440, %v415
      %449 = vset.pattern.permute.xlu0 0
      %450 = vperm.xlu0 %449, %v416
      %v451 = vpop.permute.xlu0 %450
      %454 = vset.pattern.permute.xlu0 0
      %455 = vperm.xlu0 %454, %v417
      %v456 = vpop.permute.xlu0 %455
      %459 = vset.pattern.permute.xlu0 0
      %460 = vperm.xlu0 %459, %v418
      %v461 = vpop.permute.xlu0 %460
      %464 = vset.pattern.permute.xlu0 0
      %465 = vperm.xlu0 %464, %v419
      %v466 = vpop.permute.xlu0 %465
      %v468 = vperm.slane %v444, 0
      %v469 = vperm.slane %v445, 0
      %v470 = vperm.slane %v446, 0
      %v471 = vperm.slane %v447, 0
      %v472 = vmul.f32 %v451, %v468
      %v473 = vmul.f32 %v451, %v469
      %v474 = vmul.f32 %v451, %v470
      %v475 = vmul.f32 %v451, %v471
      %v476 = vmul.f32 %v456, %v468
      %v477 = vmul.f32 %v456, %v469
      %v478 = vmul.f32 %v456, %v470
      %v479 = vmul.f32 %v456, %v471
      %v480 = vmul.f32 %v461, %v468
      %v481 = vmul.f32 %v461, %v469
      %v482 = vmul.f32 %v461, %v470
      %v483 = vmul.f32 %v461, %v471
      %v484 = vmul.f32 %v466, %v468
      %v485 = vmul.f32 %v466, %v469
      %v486 = vmul.f32 %v466, %v470
      %v487 = vmul.f32 %v466, %v471
      %v488 = vadd.f32 %v472, 0.0
      %v489 = vadd.f32 %v473, 0.0
      %v490 = vadd.f32 %v474, 0.0
      %v491 = vadd.f32 %v475, 0.0
      %v492 = vadd.f32 %v476, 0.0
      %v493 = vadd.f32 %v477, 0.0
      %v494 = vadd.f32 %v478, 0.0
      %v495 = vadd.f32 %v479, 0.0
      %v496 = vadd.f32 %v480, 0.0
      %v497 = vadd.f32 %v481, 0.0
      %v498 = vadd.f32 %v482, 0.0
      %v499 = vadd.f32 %v483, 0.0
      %v500 = vadd.f32 %v484, 0.0
      %v501 = vadd.f32 %v485, 0.0
      %v502 = vadd.f32 %v486, 0.0
      %v503 = vadd.f32 %v487, 0.0
      %504 = vrot.lane.b32.xlu0 %v421, 16
      %v505 = vpop.permute.xlu0 %504
      %506 = vrot.lane.b32.xlu0 %v422, 16
      %v507 = vpop.permute.xlu0 %506
      %508 = vrot.lane.b32.xlu0 %v423, 16
      %v509 = vpop.permute.xlu0 %508
      %510 = vrot.lane.b32.xlu0 %v424, 16
      %v511 = vpop.permute.xlu0 %510
      %vm512 = vcmp.lt.s32.totalorder %v438, 16
      %v513 = vsel %vm512, %v509, %v511
      %v514 = vsel %vm512, %v507, %v509
      %v515 = vsel %vm512, %v505, %v507
      %v516 = vsel %vm512, %v511, %v505
      %v521 = vrot.slane %v412, 1
      %v522 = vrot.slane %v413, 1
      %v523 = vrot.slane %v414, 1
      %v524 = vrot.slane %v415, 1
      %v529 = vmul.f32 %v516, %v521
      %v530 = vmul.f32 %v515, %v522
      %v531 = vmul.f32 %v514, %v523
      %v532 = vmul.f32 %v513, %v524
      %533 = vset.pattern.permute.xlu0 1
      %534 = vperm.xlu0 %533, %v416
      %v535 = vpop.permute.xlu0 %534
      %537 = vset.pattern.permute.xlu0 1
      %538 = vperm.xlu0 %537, %v417
      %v539 = vpop.permute.xlu0 %538
      %541 = vset.pattern.permute.xlu0 1
      %542 = vperm.xlu0 %541, %v418
      %v543 = vpop.permute.xlu0 %542
      %545 = vset.pattern.permute.xlu0 1
      %546 = vperm.xlu0 %545, %v419
      %v547 = vpop.permute.xlu0 %546
      %v549 = vperm.slane %v529, 0
      %v550 = vperm.slane %v530, 0
      %v551 = vperm.slane %v531, 0
      %v552 = vperm.slane %v532, 0
      %v553 = vmul.f32 %v535, %v549
      %v554 = vmul.f32 %v535, %v550
      %v555 = vmul.f32 %v535, %v551
      %v556 = vmul.f32 %v535, %v552
      %v557 = vmul.f32 %v539, %v549
      %v558 = vmul.f32 %v539, %v550
      %v559 = vmul.f32 %v539, %v551
      %v560 = vmul.f32 %v539, %v552
      %v561 = vmul.f32 %v543, %v549
      %v562 = vmul.f32 %v543, %v550
      %v563 = vmul.f32 %v543, %v551
      %v564 = vmul.f32 %v543, %v552
      %v565 = vmul.f32 %v547, %v549
      %v566 = vmul.f32 %v547, %v550
      %v567 = vmul.f32 %v547, %v551
      %v568 = vmul.f32 %v547, %v552
      %v569 = vadd.f32 %v488, %v553
      %v570 = vadd.f32 %v489, %v554
      %v571 = vadd.f32 %v490, %v555
      %v572 = vadd.f32 %v491, %v556
      %v573 = vadd.f32 %v492, %v557
      %v574 = vadd.f32 %v493, %v558
      %v575 = vadd.f32 %v494, %v559
      %v576 = vadd.f32 %v495, %v560
      %v577 = vadd.f32 %v496, %v561
      %v578 = vadd.f32 %v497, %v562
      %v579 = vadd.f32 %v498, %v563
      %v580 = vadd.f32 %v499, %v564
      %v581 = vadd.f32 %v500, %v565
      %v582 = vadd.f32 %v501, %v566
      %v583 = vadd.f32 %v502, %v567
      %v584 = vadd.f32 %v503, %v568
      %585 = vrot.lane.b32.xlu0 %v421, 15
      %v586 = vpop.permute.xlu0 %585
      %587 = vrot.lane.b32.xlu0 %v422, 15
      %v588 = vpop.permute.xlu0 %587
      %589 = vrot.lane.b32.xlu0 %v423, 15
      %v590 = vpop.permute.xlu0 %589
      %591 = vrot.lane.b32.xlu0 %v424, 15
      %v592 = vpop.permute.xlu0 %591
      %vm593 = vcmp.lt.s32.totalorder %v438, 15
      %v594 = vsel %vm593, %v590, %v592
      %v595 = vsel %vm593, %v588, %v590
      %v596 = vsel %vm593, %v586, %v588
      %v597 = vsel %vm593, %v592, %v586
      %v598 = vrot.slane %v412, 2
      %v599 = vrot.slane %v413, 2
      %v600 = vrot.slane %v414, 2
      %v601 = vrot.slane %v415, 2
      %v606 = vmul.f32 %v597, %v598
      %v607 = vmul.f32 %v596, %v599
      %v608 = vmul.f32 %v595, %v600
      %v609 = vmul.f32 %v594, %v601
      %610 = vset.pattern.permute.xlu0 2
      %611 = vperm.xlu0 %610, %v416
      %v612 = vpop.permute.xlu0 %611
      %614 = vset.pattern.permute.xlu0 2
      %615 = vperm.xlu0 %614, %v417
      %v616 = vpop.permute.xlu0 %615
      %618 = vset.pattern.permute.xlu0 2
      %619 = vperm.xlu0 %618, %v418
      %v620 = vpop.permute.xlu0 %619
      %622 = vset.pattern.permute.xlu0 2
      %623 = vperm.xlu0 %622, %v419
      %v624 = vpop.permute.xlu0 %623
      %v626 = vperm.slane %v606, 0
      %v627 = vperm.slane %v607, 0
      %v628 = vperm.slane %v608, 0
      %v629 = vperm.slane %v609, 0
      %v630 = vmul.f32 %v612, %v626
      %v631 = vmul.f32 %v612, %v627
      %v632 = vmul.f32 %v612, %v628
      %v633 = vmul.f32 %v612, %v629
      %v634 = vmul.f32 %v616, %v626
      %v635 = vmul.f32 %v616, %v627
      %v636 = vmul.f32 %v616, %v628
      %v637 = vmul.f32 %v616, %v629
      %v638 = vmul.f32 %v620, %v626
      %v639 = vmul.f32 %v620, %v627
      %v640 = vmul.f32 %v620, %v628
      %v641 = vmul.f32 %v620, %v629
      %v642 = vmul.f32 %v624, %v626
      %v643 = vmul.f32 %v624, %v627
      %v644 = vmul.f32 %v624, %v628
      %v645 = vmul.f32 %v624, %v629
      %v646 = vadd.f32 %v569, %v630
      %v647 = vadd.f32 %v570, %v631
      %v648 = vadd.f32 %v571, %v632
      %v649 = vadd.f32 %v572, %v633
      %v650 = vadd.f32 %v573, %v634
      %v651 = vadd.f32 %v574, %v635
      %v652 = vadd.f32 %v575, %v636
      %v653 = vadd.f32 %v576, %v637
      %v654 = vadd.f32 %v577, %v638
      %v655 = vadd.f32 %v578, %v639
      %v656 = vadd.f32 %v579, %v640
      %v657 = vadd.f32 %v580, %v641
      %v658 = vadd.f32 %v581, %v642
      %v659 = vadd.f32 %v582, %v643
      %v660 = vadd.f32 %v583, %v644
      %v661 = vadd.f32 %v584, %v645
      %662 = vrot.lane.b32.xlu0 %v421, 1
      %v663 = vpop.permute.xlu0 %662
      %664 = vrot.lane.b32.xlu0 %v422, 1
      %v665 = vpop.permute.xlu0 %664
      %666 = vrot.lane.b32.xlu0 %v423, 1
      %v667 = vpop.permute.xlu0 %666
      %668 = vrot.lane.b32.xlu0 %v424, 1
      %v669 = vpop.permute.xlu0 %668
      %vm670 = vcmp.lt.s32.totalorder %v438, 1
      %v671 = vsel %vm670, %v667, %v669
      %v672 = vsel %vm670, %v665, %v667
      %v673 = vsel %vm670, %v663, %v665
      %v674 = vsel %vm670, %v669, %v663
      %v675 = vrot.slane %v412, 3
      %v676 = vrot.slane %v413, 3
      %v677 = vrot.slane %v414, 3
      %v678 = vrot.slane %v415, 3
      %v683 = vmul.f32 %v674, %v675
      %v684 = vmul.f32 %v673, %v676
      %v685 = vmul.f32 %v672, %v677
      %v686 = vmul.f32 %v671, %v678
      %687 = vset.pattern.permute.xlu0 3
      %688 = vperm.xlu0 %687, %v416
      %v689 = vpop.permute.xlu0 %688
      %691 = vset.pattern.permute.xlu0 3
      %692 = vperm.xlu0 %691, %v417
      %v693 = vpop.permute.xlu0 %692
      %695 = vset.pattern.permute.xlu0 3
      %696 = vperm.xlu0 %695, %v418
      %v697 = vpop.permute.xlu0 %696
      %699 = vset.pattern.permute.xlu0 3
      %700 = vperm.xlu0 %699, %v419
      %v701 = vpop.permute.xlu0 %700
      %v703 = vperm.slane %v683, 0
      %v704 = vperm.slane %v684, 0
      %v705 = vperm.slane %v685, 0
      %v706 = vperm.slane %v686, 0
      %v707 = vmul.f32 %v689, %v703
      %v708 = vmul.f32 %v689, %v704
      %v709 = vmul.f32 %v689, %v705
      %v710 = vmul.f32 %v689, %v706
      %v711 = vmul.f32 %v693, %v703
      %v712 = vmul.f32 %v693, %v704
      %v713 = vmul.f32 %v693, %v705
      %v714 = vmul.f32 %v693, %v706
      %v715 = vmul.f32 %v697, %v703
      %v716 = vmul.f32 %v697, %v704
      %v717 = vmul.f32 %v697, %v705
      %v718 = vmul.f32 %v697, %v706
      %v719 = vmul.f32 %v701, %v703
      %v720 = vmul.f32 %v701, %v704
      %v721 = vmul.f32 %v701, %v705
      %v722 = vmul.f32 %v701, %v706
      %v723 = vadd.f32 %v646, %v707
      %v724 = vadd.f32 %v647, %v708
      %v725 = vadd.f32 %v648, %v709
      %v726 = vadd.f32 %v649, %v710
      %v727 = vadd.f32 %v650, %v711
      %v728 = vadd.f32 %v651, %v712
      %v729 = vadd.f32 %v652, %v713
      %v730 = vadd.f32 %v653, %v714
      %v731 = vadd.f32 %v654, %v715
      %v732 = vadd.f32 %v655, %v716
      %v733 = vadd.f32 %v656, %v717
      %v734 = vadd.f32 %v657, %v718
      %v735 = vadd.f32 %v658, %v719
      %v736 = vadd.f32 %v659, %v720
      %v737 = vadd.f32 %v660, %v721
      %v738 = vadd.f32 %v661, %v722
      %v739 = vld [vmem:[%s3] sm:$0xff]
      %v740 = vld [vmem:[%s3 + $0x8] sm:$0xff]
      %v741 = vld [vmem:[%s3 + $0x10] sm:$0xff]
      %v742 = vld [vmem:[%s3 + $0x18] sm:$0xff]
      %744 = vset.pattern.permute.xlu0 0
      %745 = vperm.xlu0 %744, %v739
      %v746 = vpop.permute.xlu0 %745
      %749 = vset.pattern.permute.xlu0 0
      %750 = vperm.xlu0 %749, %v740
      %v751 = vpop.permute.xlu0 %750
      %754 = vset.pattern.permute.xlu0 0
      %755 = vperm.xlu0 %754, %v741
      %v756 = vpop.permute.xlu0 %755
      %759 = vset.pattern.permute.xlu0 0
      %760 = vperm.xlu0 %759, %v742
      %v761 = vpop.permute.xlu0 %760
      %v763 = vadd.f32 %v723, %v746
      %v764 = vadd.f32 %v724, %v746
      %v765 = vadd.f32 %v725, %v746
      %v766 = vadd.f32 %v726, %v746
      %v767 = vadd.f32 %v727, %v751
      %v768 = vadd.f32 %v728, %v751
      %v769 = vadd.f32 %v729, %v751
      %v770 = vadd.f32 %v730, %v751
      %v771 = vadd.f32 %v731, %v756
      %v772 = vadd.f32 %v732, %v756
      %v773 = vadd.f32 %v733, %v756
      %v774 = vadd.f32 %v734, %v756
      %v775 = vadd.f32 %v735, %v761
      %v776 = vadd.f32 %v736, %v761
      %v777 = vadd.f32 %v737, %v761
      %v778 = vadd.f32 %v738, %v761
      %vm779 = vcmp.gt.f32.partialorder %v763, 0.0
      %vm780 = vcmp.gt.f32.partialorder %v764, 0.0
      %vm781 = vcmp.gt.f32.partialorder %v765, 0.0
      %vm782 = vcmp.gt.f32.partialorder %v766, 0.0
      %vm783 = vcmp.gt.f32.partialorder %v767, 0.0
      %vm784 = vcmp.gt.f32.partialorder %v768, 0.0
      %vm785 = vcmp.gt.f32.partialorder %v769, 0.0
      %vm786 = vcmp.gt.f32.partialorder %v770, 0.0
      %vm787 = vcmp.gt.f32.partialorder %v771, 0.0
      %vm788 = vcmp.gt.f32.partialorder %v772, 0.0
      %vm789 = vcmp.gt.f32.partialorder %v773, 0.0
      %vm790 = vcmp.gt.f32.partialorder %v774, 0.0
      %vm791 = vcmp.gt.f32.partialorder %v775, 0.0
      %vm792 = vcmp.gt.f32.partialorder %v776, 0.0
      %vm793 = vcmp.gt.f32.partialorder %v777, 0.0
      %vm794 = vcmp.gt.f32.partialorder %v778, 0.0
      %v795 = vld [vmem:[%s4] sm:$0xff]
      %v796 = vld [vmem:[%s4 + $0x8] sm:$0xff]
      %v797 = vld [vmem:[%s4 + $0x10] sm:$0xff]
      %v798 = vld [vmem:[%s4 + $0x18] sm:$0xff]
      %800 = vset.pattern.permute.xlu0 0
      %801 = vperm.xlu0 %800, %v795
      %v802 = vpop.permute.xlu0 %801
      %805 = vset.pattern.permute.xlu0 0
      %806 = vperm.xlu0 %805, %v796
      %v807 = vpop.permute.xlu0 %806
      %810 = vset.pattern.permute.xlu0 0
      %811 = vperm.xlu0 %810, %v797
      %v812 = vpop.permute.xlu0 %811
      %815 = vset.pattern.permute.xlu0 0
      %816 = vperm.xlu0 %815, %v798
      %v817 = vpop.permute.xlu0 %816
      %v819 = vmul.f32 %v763, %v802
      %v820 = vmul.f32 %v764, %v802
      %v821 = vmul.f32 %v765, %v802
      %v822 = vmul.f32 %v766, %v802
      %v823 = vmul.f32 %v767, %v807
      %v824 = vmul.f32 %v768, %v807
      %v825 = vmul.f32 %v769, %v807
      %v826 = vmul.f32 %v770, %v807
      %v827 = vmul.f32 %v771, %v812
      %v828 = vmul.f32 %v772, %v812
      %v829 = vmul.f32 %v773, %v812
      %v830 = vmul.f32 %v774, %v812
      %v831 = vmul.f32 %v775, %v817
      %v832 = vmul.f32 %v776, %v817
      %v833 = vmul.f32 %v777, %v817
      %v834 = vmul.f32 %v778, %v817
      %v835 = vsel %vm779, %v763, %v819
      %v836 = vsel %vm780, %v764, %v820
      %v837 = vsel %vm781, %v765, %v821
      %v838 = vsel %vm782, %v766, %v822
      %v839 = vsel %vm783, %v767, %v823
      %v840 = vsel %vm784, %v768, %v824
      %v841 = vsel %vm785, %v769, %v825
      %v842 = vsel %vm786, %v770, %v826
      %v843 = vsel %vm787, %v771, %v827
      %v844 = vsel %vm788, %v772, %v828
      %v845 = vsel %vm789, %v773, %v829
      %v846 = vsel %vm790, %v774, %v830
      %v847 = vsel %vm791, %v775, %v831
      %v848 = vsel %vm792, %v776, %v832
      %v849 = vsel %vm793, %v777, %v833
      %v850 = vsel %vm794, %v778, %v834
      %v851 = vld [vmem:[%s5] sm:$0xff]
      %v852 = vld [vmem:[%s5 + $0x8] sm:$0xff]
      %v853 = vld [vmem:[%s5 + $0x10] sm:$0xff]
      %v854 = vld [vmem:[%s5 + $0x18] sm:$0xff]
      %855 = vrot.lane.b32.xlu0 %v835, 17
      %v856 = vpop.permute.xlu0 %855
      %857 = vrot.lane.b32.xlu0 %v839, 17
      %v858 = vpop.permute.xlu0 %857
      %859 = vrot.lane.b32.xlu0 %v843, 17
      %v860 = vpop.permute.xlu0 %859
      %861 = vrot.lane.b32.xlu0 %v847, 17
      %v862 = vpop.permute.xlu0 %861
      %863 = vrot.lane.b32.xlu0 %v836, 17
      %v864 = vpop.permute.xlu0 %863
      %865 = vrot.lane.b32.xlu0 %v840, 17
      %v866 = vpop.permute.xlu0 %865
      %867 = vrot.lane.b32.xlu0 %v844, 17
      %v868 = vpop.permute.xlu0 %867
      %869 = vrot.lane.b32.xlu0 %v848, 17
      %v870 = vpop.permute.xlu0 %869
      %871 = vrot.lane.b32.xlu0 %v837, 17
      %v872 = vpop.permute.xlu0 %871
      %873 = vrot.lane.b32.xlu0 %v841, 17
      %v874 = vpop.permute.xlu0 %873
      %875 = vrot.lane.b32.xlu0 %v845, 17
      %v876 = vpop.permute.xlu0 %875
      %877 = vrot.lane.b32.xlu0 %v849, 17
      %v878 = vpop.permute.xlu0 %877
      %879 = vrot.lane.b32.xlu0 %v838, 17
      %v880 = vpop.permute.xlu0 %879
      %881 = vrot.lane.b32.xlu0 %v842, 17
      %v882 = vpop.permute.xlu0 %881
      %883 = vrot.lane.b32.xlu0 %v846, 17
      %v884 = vpop.permute.xlu0 %883
      %885 = vrot.lane.b32.xlu0 %v850, 17
      %v886 = vpop.permute.xlu0 %885
      %v887 = vsel %vm439, %v872, %v880
      %v888 = vsel %vm439, %v874, %v882
      %v889 = vsel %vm439, %v876, %v884
      %v890 = vsel %vm439, %v878, %v886
      %v891 = vsel %vm439, %v864, %v872
      %v892 = vsel %vm439, %v866, %v874
      %v893 = vsel %vm439, %v868, %v876
      %v894 = vsel %vm439, %v870, %v878
      %v895 = vsel %vm439, %v856, %v864
      %v896 = vsel %vm439, %v858, %v866
      %v897 = vsel %vm439, %v860, %v868
      %v898 = vsel %vm439, %v862, %v870
      %v899 = vsel %vm439, %v880, %v856
      %v900 = vsel %vm439, %v882, %v858
      %v901 = vsel %vm439, %v884, %v860
      %v902 = vsel %vm439, %v886, %v862
      %v903 = vperm.slane %v412, 0
      %v904 = vperm.slane %v413, 0
      %v905 = vperm.slane %v414, 0
      %v906 = vperm.slane %v415, 0
      %v907 = vmul.f32 %v899, %v903
      %v908 = vmul.f32 %v895, %v904
      %v909 = vmul.f32 %v891, %v905
      %v910 = vmul.f32 %v887, %v906
      %v911 = vmul.f32 %v900, %v903
      %v912 = vmul.f32 %v896, %v904
      %v913 = vmul.f32 %v892, %v905
      %v914 = vmul.f32 %v888, %v906
      %v915 = vmul.f32 %v901, %v903
      %v916 = vmul.f32 %v897, %v904
      %v917 = vmul.f32 %v893, %v905
      %v918 = vmul.f32 %v889, %v906
      %v919 = vmul.f32 %v902, %v903
      %v920 = vmul.f32 %v898, %v904
      %v921 = vmul.f32 %v894, %v905
      %v922 = vmul.f32 %v890, %v906
      %s923 = scalar_lea.vmem %s5, 32
      %v924 = vld [vmem:[%s923] sm:$0xff]
      %v925 = vld [vmem:[%s923 + $0x8] sm:$0xff]
      %v926 = vld [vmem:[%s923 + $0x10] sm:$0xff]
      %v927 = vld [vmem:[%s923 + $0x18] sm:$0xff]
      %928 = vrot.lane.b32.xlu0 %v835, 16
      %v929 = vpop.permute.xlu0 %928
      %930 = vrot.lane.b32.xlu0 %v839, 16
      %v931 = vpop.permute.xlu0 %930
      %932 = vrot.lane.b32.xlu0 %v843, 16
      %v933 = vpop.permute.xlu0 %932
      %934 = vrot.lane.b32.xlu0 %v847, 16
      %v935 = vpop.permute.xlu0 %934
      %936 = vrot.lane.b32.xlu0 %v836, 16
      %v937 = vpop.permute.xlu0 %936
      %938 = vrot.lane.b32.xlu0 %v840, 16
      %v939 = vpop.permute.xlu0 %938
      %940 = vrot.lane.b32.xlu0 %v844, 16
      %v941 = vpop.permute.xlu0 %940
      %942 = vrot.lane.b32.xlu0 %v848, 16
      %v943 = vpop.permute.xlu0 %942
      %944 = vrot.lane.b32.xlu0 %v837, 16
      %v945 = vpop.permute.xlu0 %944
      %946 = vrot.lane.b32.xlu0 %v841, 16
      %v947 = vpop.permute.xlu0 %946
      %948 = vrot.lane.b32.xlu0 %v845, 16
      %v949 = vpop.permute.xlu0 %948
      %950 = vrot.lane.b32.xlu0 %v849, 16
      %v951 = vpop.permute.xlu0 %950
      %952 = vrot.lane.b32.xlu0 %v838, 16
      %v953 = vpop.permute.xlu0 %952
      %954 = vrot.lane.b32.xlu0 %v842, 16
      %v955 = vpop.permute.xlu0 %954
      %956 = vrot.lane.b32.xlu0 %v846, 16
      %v957 = vpop.permute.xlu0 %956
      %958 = vrot.lane.b32.xlu0 %v850, 16
      %v959 = vpop.permute.xlu0 %958
      %v960 = vsel %vm512, %v945, %v953
      %v961 = vsel %vm512, %v947, %v955
      %v962 = vsel %vm512, %v949, %v957
      %v963 = vsel %vm512, %v951, %v959
      %v964 = vsel %vm512, %v937, %v945
      %v965 = vsel %vm512, %v939, %v947
      %v966 = vsel %vm512, %v941, %v949
      %v967 = vsel %vm512, %v943, %v951
      %v968 = vsel %vm512, %v929, %v937
      %v969 = vsel %vm512, %v931, %v939
      %v970 = vsel %vm512, %v933, %v941
      %v971 = vsel %vm512, %v935, %v943
      %v972 = vsel %vm512, %v953, %v929
      %v973 = vsel %vm512, %v955, %v931
      %v974 = vsel %vm512, %v957, %v933
      %v975 = vsel %vm512, %v959, %v935
      %v976 = vperm.slane %v412, 1
      %v977 = vperm.slane %v413, 1
      %v978 = vperm.slane %v414, 1
      %v979 = vperm.slane %v415, 1
      %v980 = vmul.f32 %v972, %v976
      %v981 = vmul.f32 %v968, %v977
      %v982 = vmul.f32 %v964, %v978
      %v983 = vmul.f32 %v960, %v979
      %v984 = vmul.f32 %v973, %v976
      %v985 = vmul.f32 %v969, %v977
      %v986 = vmul.f32 %v965, %v978
      %v987 = vmul.f32 %v961, %v979
      %v988 = vmul.f32 %v974, %v976
      %v989 = vmul.f32 %v970, %v977
      %v990 = vmul.f32 %v966, %v978
      %v991 = vmul.f32 %v962, %v979
      %v992 = vmul.f32 %v975, %v976
      %v993 = vmul.f32 %v971, %v977
      %v994 = vmul.f32 %v967, %v978
      %v995 = vmul.f32 %v963, %v979
      %vm996 = vcmask 261120
      %v998 = vsel %vm996, %v924, 0
      %v1001 = vsel %vm996, %v925, 0
      %v1004 = vsel %vm996, %v926, 0
      %v1007 = vsel %vm996, %v927, 0
      %1009 = vmatpush.msra.mxu0 0.0
      %1010 = vmatpush.msra.mxu0 0.0
      %1011 = vmatpush.msra.mxu0 0.0
      %1012 = vmatpush.msra.mxu0 0.0
      %1013 = vmatpush.msra.mxu0 0.0
      %1014 = vmatpush.msra.mxu0 0.0
      %1015 = vmatpush.msra.mxu0 0.0
      %1016 = vmatpush.msra.mxu0 0.0
      %1017 = vmatpush.msra.mxu0 0.0
      %1018 = vmatpush.msra.mxu0 0.0
      %1019 = vmatpush.msra.mxu0 0.0
      %1020 = vmatpush.msra.mxu0 0.0
      %1021 = vmatpush.msra.mxu0 %v992
      %1022 = vmatpush.msra.mxu0 %v988
      %1023 = vmatpush.msra.mxu0 %v984
      %1024 = vmatpush.msra.mxu0 %v980
      %1025 = vmatmul.f32.gmra.mxu0 %v998
      %v1026 = vpop.f32.mrf.mxu0
      %v1027 = vadd.f32 0.0, %v1026
      %1028 = vmatmul.f32.gmra.mxu0 %v1001
      %v1029 = vpop.f32.mrf.mxu0
      %v1030 = vadd.f32 0.0, %v1029
      %1031 = vmatmul.f32.gmra.mxu0 %v1004
      %v1032 = vpop.f32.mrf.mxu0
      %v1033 = vadd.f32 0.0, %v1032
      %1034 = vmatmul.f32.gmra.mxu0 %v1007
      %v1035 = vpop.f32.mrf.mxu0
      %v1036 = vadd.f32 0.0, %v1035
      %1037 = vdwg.mxu0
      %1038 = vmatpush.msra.mxu0 0.0
      %1039 = vmatpush.msra.mxu0 0.0
      %1040 = vmatpush.msra.mxu0 0.0
      %1041 = vmatpush.msra.mxu0 0.0
      %1042 = vmatpush.msra.mxu0 0.0
      %1043 = vmatpush.msra.mxu0 0.0
      %1044 = vmatpush.msra.mxu0 0.0
      %1045 = vmatpush.msra.mxu0 0.0
      %1046 = vmatpush.msra.mxu0 0.0
      %1047 = vmatpush.msra.mxu0 0.0
      %1048 = vmatpush.msra.mxu0 0.0
      %1049 = vmatpush.msra.mxu0 0.0
      %1050 = vmatpush.msra.mxu0 %v993
      %1051 = vmatpush.msra.mxu0 %v989
      %1052 = vmatpush.msra.mxu0 %v985
      %1053 = vmatpush.msra.mxu0 %v981
      %1054 = vmatmul.f32.gmra.mxu0 %v998
      %v1055 = vpop.f32.mrf.mxu0
      %v1056 = vadd.f32 0.0, %v1055
      %1057 = vmatmul.f32.gmra.mxu0 %v1001
      %v1058 = vpop.f32.mrf.mxu0
      %v1059 = vadd.f32 0.0, %v1058
      %1060 = vmatmul.f32.gmra.mxu0 %v1004
      %v1061 = vpop.f32.mrf.mxu0
      %v1062 = vadd.f32 0.0, %v1061
      %1063 = vmatmul.f32.gmra.mxu0 %v1007
      %v1064 = vpop.f32.mrf.mxu0
      %v1065 = vadd.f32 0.0, %v1064
      %1066 = vdwg.mxu0
      %1067 = vmatpush.msra.mxu0 0.0
      %1068 = vmatpush.msra.mxu0 0.0
      %1069 = vmatpush.msra.mxu0 0.0
      %1070 = vmatpush.msra.mxu0 0.0
      %1071 = vmatpush.msra.mxu0 0.0
      %1072 = vmatpush.msra.mxu0 0.0
      %1073 = vmatpush.msra.mxu0 0.0
      %1074 = vmatpush.msra.mxu0 0.0
      %1075 = vmatpush.msra.mxu0 0.0
      %1076 = vmatpush.msra.mxu0 0.0
      %1077 = vmatpush.msra.mxu0 0.0
      %1078 = vmatpush.msra.mxu0 0.0
      %1079 = vmatpush.msra.mxu0 %v994
      %1080 = vmatpush.msra.mxu0 %v990
      %1081 = vmatpush.msra.mxu0 %v986
      %1082 = vmatpush.msra.mxu0 %v982
      %1083 = vmatmul.f32.gmra.mxu0 %v998
      %v1084 = vpop.f32.mrf.mxu0
      %v1085 = vadd.f32 0.0, %v1084
      %1086 = vmatmul.f32.gmra.mxu0 %v1001
      %v1087 = vpop.f32.mrf.mxu0
      %v1088 = vadd.f32 0.0, %v1087
      %1089 = vmatmul.f32.gmra.mxu0 %v1004
      %v1090 = vpop.f32.mrf.mxu0
      %v1091 = vadd.f32 0.0, %v1090
      %1092 = vmatmul.f32.gmra.mxu0 %v1007
      %v1093 = vpop.f32.mrf.mxu0
      %v1094 = vadd.f32 0.0, %v1093
      %1095 = vdwg.mxu0
      %1096 = vmatpush.msra.mxu0 0.0
      %1097 = vmatpush.msra.mxu0 0.0
      %1098 = vmatpush.msra.mxu0 0.0
      %1099 = vmatpush.msra.mxu0 0.0
      %1100 = vmatpush.msra.mxu0 0.0
      %1101 = vmatpush.msra.mxu0 0.0
      %1102 = vmatpush.msra.mxu0 0.0
      %1103 = vmatpush.msra.mxu0 0.0
      %1104 = vmatpush.msra.mxu0 0.0
      %1105 = vmatpush.msra.mxu0 0.0
      %1106 = vmatpush.msra.mxu0 0.0
      %1107 = vmatpush.msra.mxu0 0.0
      %1108 = vmatpush.msra.mxu0 %v995
      %1109 = vmatpush.msra.mxu0 %v991
      %1110 = vmatpush.msra.mxu0 %v987
      %1111 = vmatpush.msra.mxu0 %v983
      %1112 = vmatmul.f32.gmra.mxu0 %v998
      %v1113 = vpop.f32.mrf.mxu0
      %v1114 = vadd.f32 0.0, %v1113
      %1115 = vmatmul.f32.gmra.mxu0 %v1001
      %v1116 = vpop.f32.mrf.mxu0
      %v1117 = vadd.f32 0.0, %v1116
      %1118 = vmatmul.f32.gmra.mxu0 %v1004
      %v1119 = vpop.f32.mrf.mxu0
      %v1120 = vadd.f32 0.0, %v1119
      %1121 = vmatmul.f32.gmra.mxu0 %v1007
      %v1122 = vpop.f32.mrf.mxu0
      %v1123 = vadd.f32 0.0, %v1122
      %1124 = vdwg.mxu0
      %v1126 = vsel %vm996, %v851, 0
      %v1129 = vsel %vm996, %v852, 0
      %v1132 = vsel %vm996, %v853, 0
      %v1135 = vsel %vm996, %v854, 0
      %1137 = vmatpush.msra.mxu0 0.0
      %1138 = vmatpush.msra.mxu0 0.0
      %1139 = vmatpush.msra.mxu0 0.0
      %1140 = vmatpush.msra.mxu0 0.0
      %1141 = vmatpush.msra.mxu0 0.0
      %1142 = vmatpush.msra.mxu0 0.0
      %1143 = vmatpush.msra.mxu0 0.0
      %1144 = vmatpush.msra.mxu0 0.0
      %1145 = vmatpush.msra.mxu0 0.0
      %1146 = vmatpush.msra.mxu0 0.0
      %1147 = vmatpush.msra.mxu0 0.0
      %1148 = vmatpush.msra.mxu0 0.0
      %1149 = vmatpush.msra.mxu0 %v919
      %1150 = vmatpush.msra.mxu0 %v915
      %1151 = vmatpush.msra.mxu0 %v911
      %1152 = vmatpush.msra.mxu0 %v907
      %1153 = vmatmul.f32.gmra.mxu0 %v1126
      %v1154 = vpop.f32.mrf.mxu0
      %v1155 = vadd.f32 %v1027, %v1154
      %1156 = vmatmul.f32.gmra.mxu0 %v1129
      %v1157 = vpop.f32.mrf.mxu0
      %v1158 = vadd.f32 %v1030, %v1157
      %1159 = vmatmul.f32.gmra.mxu0 %v1132
      %v1160 = vpop.f32.mrf.mxu0
      %v1161 = vadd.f32 %v1033, %v1160
      %1162 = vmatmul.f32.gmra.mxu0 %v1135
      %v1163 = vpop.f32.mrf.mxu0
      %v1164 = vadd.f32 %v1036, %v1163
      %1165 = vdwg.mxu0
      %1166 = vmatpush.msra.mxu0 0.0
      %1167 = vmatpush.msra.mxu0 0.0
      %1168 = vmatpush.msra.mxu0 0.0
      %1169 = vmatpush.msra.mxu0 0.0
      %1170 = vmatpush.msra.mxu0 0.0
      %1171 = vmatpush.msra.mxu0 0.0
      %1172 = vmatpush.msra.mxu0 0.0
      %1173 = vmatpush.msra.mxu0 0.0
      %1174 = vmatpush.msra.mxu0 0.0
      %1175 = vmatpush.msra.mxu0 0.0
      %1176 = vmatpush.msra.mxu0 0.0
      %1177 = vmatpush.msra.mxu0 0.0
      %1178 = vmatpush.msra.mxu0 %v920
      %1179 = vmatpush.msra.mxu0 %v916
      %1180 = vmatpush.msra.mxu0 %v912
      %1181 = vmatpush.msra.mxu0 %v908
      %1182 = vmatmul.f32.gmra.mxu0 %v1126
      %v1183 = vpop.f32.mrf.mxu0
      %v1184 = vadd.f32 %v1056, %v1183
      %1185 = vmatmul.f32.gmra.mxu0 %v1129
      %v1186 = vpop.f32.mrf.mxu0
      %v1187 = vadd.f32 %v1059, %v1186
      %1188 = vmatmul.f32.gmra.mxu0 %v1132
      %v1189 = vpop.f32.mrf.mxu0
      %v1190 = vadd.f32 %v1062, %v1189
      %1191 = vmatmul.f32.gmra.mxu0 %v1135
      %v1192 = vpop.f32.mrf.mxu0
      %v1193 = vadd.f32 %v1065, %v1192
      %1194 = vdwg.mxu0
      %1195 = vmatpush.msra.mxu0 0.0
      %1196 = vmatpush.msra.mxu0 0.0
      %1197 = vmatpush.msra.mxu0 0.0
      %1198 = vmatpush.msra.mxu0 0.0
      %1199 = vmatpush.msra.mxu0 0.0
      %1200 = vmatpush.msra.mxu0 0.0
      %1201 = vmatpush.msra.mxu0 0.0
      %1202 = vmatpush.msra.mxu0 0.0
      %1203 = vmatpush.msra.mxu0 0.0
      %1204 = vmatpush.msra.mxu0 0.0
      %1205 = vmatpush.msra.mxu0 0.0
      %1206 = vmatpush.msra.mxu0 0.0
      %1207 = vmatpush.msra.mxu0 %v921
      %1208 = vmatpush.msra.mxu0 %v917
      %1209 = vmatpush.msra.mxu0 %v913
      %1210 = vmatpush.msra.mxu0 %v909
      %1211 = vmatmul.f32.gmra.mxu0 %v1126
      %v1212 = vpop.f32.mrf.mxu0
      %v1213 = vadd.f32 %v1085, %v1212
      %1214 = vmatmul.f32.gmra.mxu0 %v1129
      %v1215 = vpop.f32.mrf.mxu0
      %v1216 = vadd.f32 %v1088, %v1215
      %1217 = vmatmul.f32.gmra.mxu0 %v1132
      %v1218 = vpop.f32.mrf.mxu0
      %v1219 = vadd.f32 %v1091, %v1218
      %1220 = vmatmul.f32.gmra.mxu0 %v1135
      %v1221 = vpop.f32.mrf.mxu0
      %v1222 = vadd.f32 %v1094, %v1221
      %1223 = vdwg.mxu0
      %1224 = vmatpush.msra.mxu0 0.0
      %1225 = vmatpush.msra.mxu0 0.0
      %1226 = vmatpush.msra.mxu0 0.0
      %1227 = vmatpush.msra.mxu0 0.0
      %1228 = vmatpush.msra.mxu0 0.0
      %1229 = vmatpush.msra.mxu0 0.0
      %1230 = vmatpush.msra.mxu0 0.0
      %1231 = vmatpush.msra.mxu0 0.0
      %1232 = vmatpush.msra.mxu0 0.0
      %1233 = vmatpush.msra.mxu0 0.0
      %1234 = vmatpush.msra.mxu0 0.0
      %1235 = vmatpush.msra.mxu0 0.0
      %1236 = vmatpush.msra.mxu0 %v922
      %1237 = vmatpush.msra.mxu0 %v918
      %1238 = vmatpush.msra.mxu0 %v914
      %1239 = vmatpush.msra.mxu0 %v910
      %1240 = vmatmul.f32.gmra.mxu0 %v1126
      %v1241 = vpop.f32.mrf.mxu0
      %v1242 = vadd.f32 %v1114, %v1241
      %1243 = vmatmul.f32.gmra.mxu0 %v1129
      %v1244 = vpop.f32.mrf.mxu0
      %v1245 = vadd.f32 %v1117, %v1244
      %1246 = vmatmul.f32.gmra.mxu0 %v1132
      %v1247 = vpop.f32.mrf.mxu0
      %v1248 = vadd.f32 %v1120, %v1247
      %1249 = vmatmul.f32.gmra.mxu0 %v1135
      %v1250 = vpop.f32.mrf.mxu0
      %v1251 = vadd.f32 %v1123, %v1250
      %1252 = vdwg.mxu0
      %s1253 = scalar_lea.vmem %s5, 64
      %v1254 = vld [vmem:[%s1253] sm:$0xff]
      %v1255 = vld [vmem:[%s1253 + $0x8] sm:$0xff]
      %v1256 = vld [vmem:[%s1253 + $0x10] sm:$0xff]
      %v1257 = vld [vmem:[%s1253 + $0x18] sm:$0xff]
      %1258 = vrot.lane.b32.xlu0 %v835, 15
      %v1259 = vpop.permute.xlu0 %1258
      %1260 = vrot.lane.b32.xlu0 %v839, 15
      %v1261 = vpop.permute.xlu0 %1260
      %1262 = vrot.lane.b32.xlu0 %v843, 15
      %v1263 = vpop.permute.xlu0 %1262
      %1264 = vrot.lane.b32.xlu0 %v847, 15
      %v1265 = vpop.permute.xlu0 %1264
      %1266 = vrot.lane.b32.xlu0 %v836, 15
      %v1267 = vpop.permute.xlu0 %1266
      %1268 = vrot.lane.b32.xlu0 %v840, 15
      %v1269 = vpop.permute.xlu0 %1268
      %1270 = vrot.lane.b32.xlu0 %v844, 15
      %v1271 = vpop.permute.xlu0 %1270
      %1272 = vrot.lane.b32.xlu0 %v848, 15
      %v1273 = vpop.permute.xlu0 %1272
      %1274 = vrot.lane.b32.xlu0 %v837, 15
      %v1275 = vpop.permute.xlu0 %1274
      %1276 = vrot.lane.b32.xlu0 %v841, 15
      %v1277 = vpop.permute.xlu0 %1276
      %1278 = vrot.lane.b32.xlu0 %v845, 15
      %v1279 = vpop.permute.xlu0 %1278
      %1280 = vrot.lane.b32.xlu0 %v849, 15
      %v1281 = vpop.permute.xlu0 %1280
      %1282 = vrot.lane.b32.xlu0 %v838, 15
      %v1283 = vpop.permute.xlu0 %1282
      %1284 = vrot.lane.b32.xlu0 %v842, 15
      %v1285 = vpop.permute.xlu0 %1284
      %1286 = vrot.lane.b32.xlu0 %v846, 15
      %v1287 = vpop.permute.xlu0 %1286
      %1288 = vrot.lane.b32.xlu0 %v850, 15
      %v1289 = vpop.permute.xlu0 %1288
      %v1290 = vsel %vm593, %v1275, %v1283
      %v1291 = vsel %vm593, %v1277, %v1285
      %v1292 = vsel %vm593, %v1279, %v1287
      %v1293 = vsel %vm593, %v1281, %v1289
      %v1294 = vsel %vm593, %v1267, %v1275
      %v1295 = vsel %vm593, %v1269, %v1277
      %v1296 = vsel %vm593, %v1271, %v1279
      %v1297 = vsel %vm593, %v1273, %v1281
      %v1298 = vsel %vm593, %v1259, %v1267
      %v1299 = vsel %vm593, %v1261, %v1269
      %v1300 = vsel %vm593, %v1263, %v1271
      %v1301 = vsel %vm593, %v1265, %v1273
      %v1302 = vsel %vm593, %v1283, %v1259
      %v1303 = vsel %vm593, %v1285, %v1261
      %v1304 = vsel %vm593, %v1287, %v1263
      %v1305 = vsel %vm593, %v1289, %v1265
      %v1306 = vperm.slane %v412, 2
      %v1307 = vperm.slane %v413, 2
      %v1308 = vperm.slane %v414, 2
      %v1309 = vperm.slane %v415, 2
      %v1310 = vmul.f32 %v1302, %v1306
      %v1311 = vmul.f32 %v1298, %v1307
      %v1312 = vmul.f32 %v1294, %v1308
      %v1313 = vmul.f32 %v1290, %v1309
      %v1314 = vmul.f32 %v1303, %v1306
      %v1315 = vmul.f32 %v1299, %v1307
      %v1316 = vmul.f32 %v1295, %v1308
      %v1317 = vmul.f32 %v1291, %v1309
      %v1318 = vmul.f32 %v1304, %v1306
      %v1319 = vmul.f32 %v1300, %v1307
      %v1320 = vmul.f32 %v1296, %v1308
      %v1321 = vmul.f32 %v1292, %v1309
      %v1322 = vmul.f32 %v1305, %v1306
      %v1323 = vmul.f32 %v1301, %v1307
      %v1324 = vmul.f32 %v1297, %v1308
      %v1325 = vmul.f32 %v1293, %v1309
      %v1327 = vsel %vm996, %v1254, 0
      %v1330 = vsel %vm996, %v1255, 0
      %v1333 = vsel %vm996, %v1256, 0
      %v1336 = vsel %vm996, %v1257, 0
      %1338 = vmatpush.msra.mxu0 0.0
      %1339 = vmatpush.msra.mxu0 0.0
      %1340 = vmatpush.msra.mxu0 0.0
      %1341 = vmatpush.msra.mxu0 0.0
      %1342 = vmatpush.msra.mxu0 0.0
      %1343 = vmatpush.msra.mxu0 0.0
      %1344 = vmatpush.msra.mxu0 0.0
      %1345 = vmatpush.msra.mxu0 0.0
      %1346 = vmatpush.msra.mxu0 0.0
      %1347 = vmatpush.msra.mxu0 0.0
      %1348 = vmatpush.msra.mxu0 0.0
      %1349 = vmatpush.msra.mxu0 0.0
      %1350 = vmatpush.msra.mxu0 %v1322
      %1351 = vmatpush.msra.mxu0 %v1318
      %1352 = vmatpush.msra.mxu0 %v1314
      %1353 = vmatpush.msra.mxu0 %v1310
      %1354 = vmatmul.f32.gmra.mxu0 %v1327
      %v1355 = vpop.f32.mrf.mxu0
      %v1356 = vadd.f32 0.0, %v1355
      %1357 = vmatmul.f32.gmra.mxu0 %v1330
      %v1358 = vpop.f32.mrf.mxu0
      %v1359 = vadd.f32 0.0, %v1358
      %1360 = vmatmul.f32.gmra.mxu0 %v1333
      %v1361 = vpop.f32.mrf.mxu0
      %v1362 = vadd.f32 0.0, %v1361
      %1363 = vmatmul.f32.gmra.mxu0 %v1336
      %v1364 = vpop.f32.mrf.mxu0
      %v1365 = vadd.f32 0.0, %v1364
      %1366 = vdwg.mxu0
      %1367 = vmatpush.msra.mxu0 0.0
      %1368 = vmatpush.msra.mxu0 0.0
      %1369 = vmatpush.msra.mxu0 0.0
      %1370 = vmatpush.msra.mxu0 0.0
      %1371 = vmatpush.msra.mxu0 0.0
      %1372 = vmatpush.msra.mxu0 0.0
      %1373 = vmatpush.msra.mxu0 0.0
      %1374 = vmatpush.msra.mxu0 0.0
      %1375 = vmatpush.msra.mxu0 0.0
      %1376 = vmatpush.msra.mxu0 0.0
      %1377 = vmatpush.msra.mxu0 0.0
      %1378 = vmatpush.msra.mxu0 0.0
      %1379 = vmatpush.msra.mxu0 %v1323
      %1380 = vmatpush.msra.mxu0 %v1319
      %1381 = vmatpush.msra.mxu0 %v1315
      %1382 = vmatpush.msra.mxu0 %v1311
      %1383 = vmatmul.f32.gmra.mxu0 %v1327
      %v1384 = vpop.f32.mrf.mxu0
      %v1385 = vadd.f32 0.0, %v1384
      %1386 = vmatmul.f32.gmra.mxu0 %v1330
      %v1387 = vpop.f32.mrf.mxu0
      %v1388 = vadd.f32 0.0, %v1387
      %1389 = vmatmul.f32.gmra.mxu0 %v1333
      %v1390 = vpop.f32.mrf.mxu0
      %v1391 = vadd.f32 0.0, %v1390
      %1392 = vmatmul.f32.gmra.mxu0 %v1336
      %v1393 = vpop.f32.mrf.mxu0
      %v1394 = vadd.f32 0.0, %v1393
      %1395 = vdwg.mxu0
      %1396 = vmatpush.msra.mxu0 0.0
      %1397 = vmatpush.msra.mxu0 0.0
      %1398 = vmatpush.msra.mxu0 0.0
      %1399 = vmatpush.msra.mxu0 0.0
      %1400 = vmatpush.msra.mxu0 0.0
      %1401 = vmatpush.msra.mxu0 0.0
      %1402 = vmatpush.msra.mxu0 0.0
      %1403 = vmatpush.msra.mxu0 0.0
      %1404 = vmatpush.msra.mxu0 0.0
      %1405 = vmatpush.msra.mxu0 0.0
      %1406 = vmatpush.msra.mxu0 0.0
      %1407 = vmatpush.msra.mxu0 0.0
      %1408 = vmatpush.msra.mxu0 %v1324
      %1409 = vmatpush.msra.mxu0 %v1320
      %1410 = vmatpush.msra.mxu0 %v1316
      %1411 = vmatpush.msra.mxu0 %v1312
      %1412 = vmatmul.f32.gmra.mxu0 %v1327
      %v1413 = vpop.f32.mrf.mxu0
      %v1414 = vadd.f32 0.0, %v1413
      %1415 = vmatmul.f32.gmra.mxu0 %v1330
      %v1416 = vpop.f32.mrf.mxu0
      %v1417 = vadd.f32 0.0, %v1416
      %1418 = vmatmul.f32.gmra.mxu0 %v1333
      %v1419 = vpop.f32.mrf.mxu0
      %v1420 = vadd.f32 0.0, %v1419
      %1421 = vmatmul.f32.gmra.mxu0 %v1336
      %v1422 = vpop.f32.mrf.mxu0
      %v1423 = vadd.f32 0.0, %v1422
      %1424 = vdwg.mxu0
      %1425 = vmatpush.msra.mxu0 0.0
      %1426 = vmatpush.msra.mxu0 0.0
      %1427 = vmatpush.msra.mxu0 0.0
      %1428 = vmatpush.msra.mxu0 0.0
      %1429 = vmatpush.msra.mxu0 0.0
      %1430 = vmatpush.msra.mxu0 0.0
      %1431 = vmatpush.msra.mxu0 0.0
      %1432 = vmatpush.msra.mxu0 0.0
      %1433 = vmatpush.msra.mxu0 0.0
      %1434 = vmatpush.msra.mxu0 0.0
      %1435 = vmatpush.msra.mxu0 0.0
      %1436 = vmatpush.msra.mxu0 0.0
      %1437 = vmatpush.msra.mxu0 %v1325
      %1438 = vmatpush.msra.mxu0 %v1321
      %1439 = vmatpush.msra.mxu0 %v1317
      %1440 = vmatpush.msra.mxu0 %v1313
      %1441 = vmatmul.f32.gmra.mxu0 %v1327
      %v1442 = vpop.f32.mrf.mxu0
      %v1443 = vadd.f32 0.0, %v1442
      %1444 = vmatmul.f32.gmra.mxu0 %v1330
      %v1445 = vpop.f32.mrf.mxu0
      %v1446 = vadd.f32 0.0, %v1445
      %1447 = vmatmul.f32.gmra.mxu0 %v1333
      %v1448 = vpop.f32.mrf.mxu0
      %v1449 = vadd.f32 0.0, %v1448
      %1450 = vmatmul.f32.gmra.mxu0 %v1336
      %v1451 = vpop.f32.mrf.mxu0
      %v1452 = vadd.f32 0.0, %v1451
      %1453 = vdwg.mxu0
      %v1454 = vadd.f32 %v1155, %v1356
      %v1455 = vadd.f32 %v1184, %v1385
      %v1456 = vadd.f32 %v1213, %v1414
      %v1457 = vadd.f32 %v1242, %v1443
      %v1458 = vadd.f32 %v1158, %v1359
      %v1459 = vadd.f32 %v1187, %v1388
      %v1460 = vadd.f32 %v1216, %v1417
      %v1461 = vadd.f32 %v1245, %v1446
      %v1462 = vadd.f32 %v1161, %v1362
      %v1463 = vadd.f32 %v1190, %v1391
      %v1464 = vadd.f32 %v1219, %v1420
      %v1465 = vadd.f32 %v1248, %v1449
      %v1466 = vadd.f32 %v1164, %v1365
      %v1467 = vadd.f32 %v1193, %v1394
      %v1468 = vadd.f32 %v1222, %v1423
      %v1469 = vadd.f32 %v1251, %v1452
      %s1470 = scalar_lea.vmem %s5, 96
      %v1471 = vld [vmem:[%s1470] sm:$0xff]
      %v1472 = vld [vmem:[%s1470 + $0x8] sm:$0xff]
      %v1473 = vld [vmem:[%s1470 + $0x10] sm:$0xff]
      %v1474 = vld [vmem:[%s1470 + $0x18] sm:$0xff]
      %1475 = vrot.lane.b32.xlu0 %v835, 1
      %v1476 = vpop.permute.xlu0 %1475
      %1477 = vrot.lane.b32.xlu0 %v839, 1
      %v1478 = vpop.permute.xlu0 %1477
      %1479 = vrot.lane.b32.xlu0 %v843, 1
      %v1480 = vpop.permute.xlu0 %1479
      %1481 = vrot.lane.b32.xlu0 %v847, 1
      %v1482 = vpop.permute.xlu0 %1481
      %1483 = vrot.lane.b32.xlu0 %v836, 1
      %v1484 = vpop.permute.xlu0 %1483
      %1485 = vrot.lane.b32.xlu0 %v840, 1
      %v1486 = vpop.permute.xlu0 %1485
      %1487 = vrot.lane.b32.xlu0 %v844, 1
      %v1488 = vpop.permute.xlu0 %1487
      %1489 = vrot.lane.b32.xlu0 %v848, 1
      %v1490 = vpop.permute.xlu0 %1489
      %1491 = vrot.lane.b32.xlu0 %v837, 1
      %v1492 = vpop.permute.xlu0 %1491
      %1493 = vrot.lane.b32.xlu0 %v841, 1
      %v1494 = vpop.permute.xlu0 %1493
      %1495 = vrot.lane.b32.xlu0 %v845, 1
      %v1496 = vpop.permute.xlu0 %1495
      %1497 = vrot.lane.b32.xlu0 %v849, 1
      %v1498 = vpop.permute.xlu0 %1497
      %1499 = vrot.lane.b32.xlu0 %v838, 1
      %v1500 = vpop.permute.xlu0 %1499
      %1501 = vrot.lane.b32.xlu0 %v842, 1
      %v1502 = vpop.permute.xlu0 %1501
      %1503 = vrot.lane.b32.xlu0 %v846, 1
      %v1504 = vpop.permute.xlu0 %1503
      %1505 = vrot.lane.b32.xlu0 %v850, 1
      %v1506 = vpop.permute.xlu0 %1505
      %v1507 = vsel %vm670, %v1492, %v1500
      %v1508 = vsel %vm670, %v1494, %v1502
      %v1509 = vsel %vm670, %v1496, %v1504
      %v1510 = vsel %vm670, %v1498, %v1506
      %v1511 = vsel %vm670, %v1484, %v1492
      %v1512 = vsel %vm670, %v1486, %v1494
      %v1513 = vsel %vm670, %v1488, %v1496
      %v1514 = vsel %vm670, %v1490, %v1498
      %v1515 = vsel %vm670, %v1476, %v1484
      %v1516 = vsel %vm670, %v1478, %v1486
      %v1517 = vsel %vm670, %v1480, %v1488
      %v1518 = vsel %vm670, %v1482, %v1490
      %v1519 = vsel %vm670, %v1500, %v1476
      %v1520 = vsel %vm670, %v1502, %v1478
      %v1521 = vsel %vm670, %v1504, %v1480
      %v1522 = vsel %vm670, %v1506, %v1482
      %v1523 = vperm.slane %v412, 3
      %v1524 = vperm.slane %v413, 3
      %v1525 = vperm.slane %v414, 3
      %v1526 = vperm.slane %v415, 3
      %v1527 = vmul.f32 %v1519, %v1523
      %v1528 = vmul.f32 %v1515, %v1524
      %v1529 = vmul.f32 %v1511, %v1525
      %v1530 = vmul.f32 %v1507, %v1526
      %v1531 = vmul.f32 %v1520, %v1523
      %v1532 = vmul.f32 %v1516, %v1524
      %v1533 = vmul.f32 %v1512, %v1525
      %v1534 = vmul.f32 %v1508, %v1526
      %v1535 = vmul.f32 %v1521, %v1523
      %v1536 = vmul.f32 %v1517, %v1524
      %v1537 = vmul.f32 %v1513, %v1525
      %v1538 = vmul.f32 %v1509, %v1526
      %v1539 = vmul.f32 %v1522, %v1523
      %v1540 = vmul.f32 %v1518, %v1524
      %v1541 = vmul.f32 %v1514, %v1525
      %v1542 = vmul.f32 %v1510, %v1526
      %v1544 = vsel %vm996, %v1471, 0
      %v1547 = vsel %vm996, %v1472, 0
      %v1550 = vsel %vm996, %v1473, 0
      %v1553 = vsel %vm996, %v1474, 0
      %1555 = vmatpush.msra.mxu0 0.0
      %1556 = vmatpush.msra.mxu0 0.0
      %1557 = vmatpush.msra.mxu0 0.0
      %1558 = vmatpush.msra.mxu0 0.0
      %1559 = vmatpush.msra.mxu0 0.0
      %1560 = vmatpush.msra.mxu0 0.0
      %1561 = vmatpush.msra.mxu0 0.0
      %1562 = vmatpush.msra.mxu0 0.0
      %1563 = vmatpush.msra.mxu0 0.0
      %1564 = vmatpush.msra.mxu0 0.0
      %1565 = vmatpush.msra.mxu0 0.0
      %1566 = vmatpush.msra.mxu0 0.0
      %1567 = vmatpush.msra.mxu0 %v1539
      %1568 = vmatpush.msra.mxu0 %v1535
      %1569 = vmatpush.msra.mxu0 %v1531
      %1570 = vmatpush.msra.mxu0 %v1527
      %1571 = vmatmul.f32.gmra.mxu0 %v1544
      %v1572 = vpop.f32.mrf.mxu0
      %v1573 = vadd.f32 0.0, %v1572
      %1574 = vmatmul.f32.gmra.mxu0 %v1547
      %v1575 = vpop.f32.mrf.mxu0
      %v1576 = vadd.f32 0.0, %v1575
      %1577 = vmatmul.f32.gmra.mxu0 %v1550
      %v1578 = vpop.f32.mrf.mxu0
      %v1579 = vadd.f32 0.0, %v1578
      %1580 = vmatmul.f32.gmra.mxu0 %v1553
      %v1581 = vpop.f32.mrf.mxu0
      %v1582 = vadd.f32 0.0, %v1581
      %1583 = vdwg.mxu0
      %1584 = vmatpush.msra.mxu0 0.0
      %1585 = vmatpush.msra.mxu0 0.0
      %1586 = vmatpush.msra.mxu0 0.0
      %1587 = vmatpush.msra.mxu0 0.0
      %1588 = vmatpush.msra.mxu0 0.0
      %1589 = vmatpush.msra.mxu0 0.0
      %1590 = vmatpush.msra.mxu0 0.0
      %1591 = vmatpush.msra.mxu0 0.0
      %1592 = vmatpush.msra.mxu0 0.0
      %1593 = vmatpush.msra.mxu0 0.0
      %1594 = vmatpush.msra.mxu0 0.0
      %1595 = vmatpush.msra.mxu0 0.0
      %1596 = vmatpush.msra.mxu0 %v1540
      %1597 = vmatpush.msra.mxu0 %v1536
      %1598 = vmatpush.msra.mxu0 %v1532
      %1599 = vmatpush.msra.mxu0 %v1528
      %1600 = vmatmul.f32.gmra.mxu0 %v1544
      %v1601 = vpop.f32.mrf.mxu0
      %v1602 = vadd.f32 0.0, %v1601
      %1603 = vmatmul.f32.gmra.mxu0 %v1547
      %v1604 = vpop.f32.mrf.mxu0
      %v1605 = vadd.f32 0.0, %v1604
      %1606 = vmatmul.f32.gmra.mxu0 %v1550
      %v1607 = vpop.f32.mrf.mxu0
      %v1608 = vadd.f32 0.0, %v1607
      %1609 = vmatmul.f32.gmra.mxu0 %v1553
      %v1610 = vpop.f32.mrf.mxu0
      %v1611 = vadd.f32 0.0, %v1610
      %1612 = vdwg.mxu0
      %1613 = vmatpush.msra.mxu0 0.0
      %1614 = vmatpush.msra.mxu0 0.0
      %1615 = vmatpush.msra.mxu0 0.0
      %1616 = vmatpush.msra.mxu0 0.0
      %1617 = vmatpush.msra.mxu0 0.0
      %1618 = vmatpush.msra.mxu0 0.0
      %1619 = vmatpush.msra.mxu0 0.0
      %1620 = vmatpush.msra.mxu0 0.0
      %1621 = vmatpush.msra.mxu0 0.0
      %1622 = vmatpush.msra.mxu0 0.0
      %1623 = vmatpush.msra.mxu0 0.0
      %1624 = vmatpush.msra.mxu0 0.0
      %1625 = vmatpush.msra.mxu0 %v1541
      %1626 = vmatpush.msra.mxu0 %v1537
      %1627 = vmatpush.msra.mxu0 %v1533
      %1628 = vmatpush.msra.mxu0 %v1529
      %1629 = vmatmul.f32.gmra.mxu0 %v1544
      %v1630 = vpop.f32.mrf.mxu0
      %v1631 = vadd.f32 0.0, %v1630
      %1632 = vmatmul.f32.gmra.mxu0 %v1547
      %v1633 = vpop.f32.mrf.mxu0
      %v1634 = vadd.f32 0.0, %v1633
      %1635 = vmatmul.f32.gmra.mxu0 %v1550
      %v1636 = vpop.f32.mrf.mxu0
      %v1637 = vadd.f32 0.0, %v1636
      %1638 = vmatmul.f32.gmra.mxu0 %v1553
      %v1639 = vpop.f32.mrf.mxu0
      %v1640 = vadd.f32 0.0, %v1639
      %1641 = vdwg.mxu0
      %1642 = vmatpush.msra.mxu0 0.0
      %1643 = vmatpush.msra.mxu0 0.0
      %1644 = vmatpush.msra.mxu0 0.0
      %1645 = vmatpush.msra.mxu0 0.0
      %1646 = vmatpush.msra.mxu0 0.0
      %1647 = vmatpush.msra.mxu0 0.0
      %1648 = vmatpush.msra.mxu0 0.0
      %1649 = vmatpush.msra.mxu0 0.0
      %1650 = vmatpush.msra.mxu0 0.0
      %1651 = vmatpush.msra.mxu0 0.0
      %1652 = vmatpush.msra.mxu0 0.0
      %1653 = vmatpush.msra.mxu0 0.0
      %1654 = vmatpush.msra.mxu0 %v1542
      %1655 = vmatpush.msra.mxu0 %v1538
      %1656 = vmatpush.msra.mxu0 %v1534
      %1657 = vmatpush.msra.mxu0 %v1530
      %1658 = vmatmul.f32.gmra.mxu0 %v1544
      %v1659 = vpop.f32.mrf.mxu0
      %v1660 = vadd.f32 0.0, %v1659
      %1661 = vmatmul.f32.gmra.mxu0 %v1547
      %v1662 = vpop.f32.mrf.mxu0
      %v1663 = vadd.f32 0.0, %v1662
      %1664 = vmatmul.f32.gmra.mxu0 %v1550
      %v1665 = vpop.f32.mrf.mxu0
      %v1666 = vadd.f32 0.0, %v1665
      %1667 = vmatmul.f32.gmra.mxu0 %v1553
      %v1668 = vpop.f32.mrf.mxu0
      %v1669 = vadd.f32 0.0, %v1668
      %1670 = vdwg.mxu0
      %v1671 = vadd.f32 %v1454, %v1573
      %v1672 = vadd.f32 %v1455, %v1602
      %v1673 = vadd.f32 %v1456, %v1631
      %v1674 = vadd.f32 %v1457, %v1660
      %v1675 = vadd.f32 %v1458, %v1576
      %v1676 = vadd.f32 %v1459, %v1605
      %v1677 = vadd.f32 %v1460, %v1634
      %v1678 = vadd.f32 %v1461, %v1663
      %v1679 = vadd.f32 %v1462, %v1579
      %v1680 = vadd.f32 %v1463, %v1608
      %v1681 = vadd.f32 %v1464, %v1637
      %v1682 = vadd.f32 %v1465, %v1666
      %v1683 = vadd.f32 %v1466, %v1582
      %v1684 = vadd.f32 %v1467, %v1611
      %v1685 = vadd.f32 %v1468, %v1640
      %v1686 = vadd.f32 %v1469, %v1669
      %s1687 = scalar_lea.vmem %s5, 128
      %v1688 = vld [vmem:[%s1687] sm:$0xff]
      %v1689 = vld [vmem:[%s1687 + $0x8] sm:$0xff]
      %v1690 = vld [vmem:[%s1687 + $0x10] sm:$0xff]
      %v1691 = vld [vmem:[%s1687 + $0x18] sm:$0xff]
      %v1692 = vperm.slane %v412, 4
      %v1693 = vperm.slane %v413, 4
      %v1694 = vperm.slane %v414, 4
      %v1695 = vperm.slane %v415, 4
      %v1696 = vmul.f32 %v835, %v1692
      %v1697 = vmul.f32 %v836, %v1693
      %v1698 = vmul.f32 %v837, %v1694
      %v1699 = vmul.f32 %v838, %v1695
      %v1700 = vmul.f32 %v839, %v1692
      %v1701 = vmul.f32 %v840, %v1693
      %v1702 = vmul.f32 %v841, %v1694
      %v1703 = vmul.f32 %v842, %v1695
      %v1704 = vmul.f32 %v843, %v1692
      %v1705 = vmul.f32 %v844, %v1693
      %v1706 = vmul.f32 %v845, %v1694
      %v1707 = vmul.f32 %v846, %v1695
      %v1708 = vmul.f32 %v847, %v1692
      %v1709 = vmul.f32 %v848, %v1693
      %v1710 = vmul.f32 %v849, %v1694
      %v1711 = vmul.f32 %v850, %v1695
      %v1713 = vsel %vm996, %v1688, 0
      %v1716 = vsel %vm996, %v1689, 0
      %v1719 = vsel %vm996, %v1690, 0
      %v1722 = vsel %vm996, %v1691, 0
      %1724 = vmatpush.msra.mxu0 0.0
      %1725 = vmatpush.msra.mxu0 0.0
      %1726 = vmatpush.msra.mxu0 0.0
      %1727 = vmatpush.msra.mxu0 0.0
      %1728 = vmatpush.msra.mxu0 0.0
      %1729 = vmatpush.msra.mxu0 0.0
      %1730 = vmatpush.msra.mxu0 0.0
      %1731 = vmatpush.msra.mxu0 0.0
      %1732 = vmatpush.msra.mxu0 0.0
      %1733 = vmatpush.msra.mxu0 0.0
      %1734 = vmatpush.msra.mxu0 0.0
      %1735 = vmatpush.msra.mxu0 0.0
      %1736 = vmatpush.msra.mxu0 %v1708
      %1737 = vmatpush.msra.mxu0 %v1704
      %1738 = vmatpush.msra.mxu0 %v1700
      %1739 = vmatpush.msra.mxu0 %v1696
      %1740 = vmatmul.f32.gmra.mxu0 %v1713
      %v1741 = vpop.f32.mrf.mxu0
      %v1742 = vadd.f32 0.0, %v1741
      %1743 = vmatmul.f32.gmra.mxu0 %v1716
      %v1744 = vpop.f32.mrf.mxu0
      %v1745 = vadd.f32 0.0, %v1744
      %1746 = vmatmul.f32.gmra.mxu0 %v1719
      %v1747 = vpop.f32.mrf.mxu0
      %v1748 = vadd.f32 0.0, %v1747
      %1749 = vmatmul.f32.gmra.mxu0 %v1722
      %v1750 = vpop.f32.mrf.mxu0
      %v1751 = vadd.f32 0.0, %v1750
      %1752 = vdwg.mxu0
      %1753 = vmatpush.msra.mxu0 0.0
      %1754 = vmatpush.msra.mxu0 0.0
      %1755 = vmatpush.msra.mxu0 0.0
      %1756 = vmatpush.msra.mxu0 0.0
      %1757 = vmatpush.msra.mxu0 0.0
      %1758 = vmatpush.msra.mxu0 0.0
      %1759 = vmatpush.msra.mxu0 0.0
      %1760 = vmatpush.msra.mxu0 0.0
      %1761 = vmatpush.msra.mxu0 0.0
      %1762 = vmatpush.msra.mxu0 0.0
      %1763 = vmatpush.msra.mxu0 0.0
      %1764 = vmatpush.msra.mxu0 0.0
      %1765 = vmatpush.msra.mxu0 %v1709
      %1766 = vmatpush.msra.mxu0 %v1705
      %1767 = vmatpush.msra.mxu0 %v1701
      %1768 = vmatpush.msra.mxu0 %v1697
      %1769 = vmatmul.f32.gmra.mxu0 %v1713
      %v1770 = vpop.f32.mrf.mxu0
      %v1771 = vadd.f32 0.0, %v1770
      %1772 = vmatmul.f32.gmra.mxu0 %v1716
      %v1773 = vpop.f32.mrf.mxu0
      %v1774 = vadd.f32 0.0, %v1773
      %1775 = vmatmul.f32.gmra.mxu0 %v1719
      %v1776 = vpop.f32.mrf.mxu0
      %v1777 = vadd.f32 0.0, %v1776
      %1778 = vmatmul.f32.gmra.mxu0 %v1722
      %v1779 = vpop.f32.mrf.mxu0
      %v1780 = vadd.f32 0.0, %v1779
      %1781 = vdwg.mxu0
      %1782 = vmatpush.msra.mxu0 0.0
      %1783 = vmatpush.msra.mxu0 0.0
      %1784 = vmatpush.msra.mxu0 0.0
      %1785 = vmatpush.msra.mxu0 0.0
      %1786 = vmatpush.msra.mxu0 0.0
      %1787 = vmatpush.msra.mxu0 0.0
      %1788 = vmatpush.msra.mxu0 0.0
      %1789 = vmatpush.msra.mxu0 0.0
      %1790 = vmatpush.msra.mxu0 0.0
      %1791 = vmatpush.msra.mxu0 0.0
      %1792 = vmatpush.msra.mxu0 0.0
      %1793 = vmatpush.msra.mxu0 0.0
      %1794 = vmatpush.msra.mxu0 %v1710
      %1795 = vmatpush.msra.mxu0 %v1706
      %1796 = vmatpush.msra.mxu0 %v1702
      %1797 = vmatpush.msra.mxu0 %v1698
      %1798 = vmatmul.f32.gmra.mxu0 %v1713
      %v1799 = vpop.f32.mrf.mxu0
      %v1800 = vadd.f32 0.0, %v1799
      %1801 = vmatmul.f32.gmra.mxu0 %v1716
      %v1802 = vpop.f32.mrf.mxu0
      %v1803 = vadd.f32 0.0, %v1802
      %1804 = vmatmul.f32.gmra.mxu0 %v1719
      %v1805 = vpop.f32.mrf.mxu0
      %v1806 = vadd.f32 0.0, %v1805
      %1807 = vmatmul.f32.gmra.mxu0 %v1722
      %v1808 = vpop.f32.mrf.mxu0
      %v1809 = vadd.f32 0.0, %v1808
      %1810 = vdwg.mxu0
      %1811 = vmatpush.msra.mxu0 0.0
      %1812 = vmatpush.msra.mxu0 0.0
      %1813 = vmatpush.msra.mxu0 0.0
      %1814 = vmatpush.msra.mxu0 0.0
      %1815 = vmatpush.msra.mxu0 0.0
      %1816 = vmatpush.msra.mxu0 0.0
      %1817 = vmatpush.msra.mxu0 0.0
      %1818 = vmatpush.msra.mxu0 0.0
      %1819 = vmatpush.msra.mxu0 0.0
      %1820 = vmatpush.msra.mxu0 0.0
      %1821 = vmatpush.msra.mxu0 0.0
      %1822 = vmatpush.msra.mxu0 0.0
      %1823 = vmatpush.msra.mxu0 %v1711
      %1824 = vmatpush.msra.mxu0 %v1707
      %1825 = vmatpush.msra.mxu0 %v1703
      %1826 = vmatpush.msra.mxu0 %v1699
      %1827 = vmatmul.f32.gmra.mxu0 %v1713
      %v1828 = vpop.f32.mrf.mxu0
      %v1829 = vadd.f32 0.0, %v1828
      %1830 = vmatmul.f32.gmra.mxu0 %v1716
      %v1831 = vpop.f32.mrf.mxu0
      %v1832 = vadd.f32 0.0, %v1831
      %1833 = vmatmul.f32.gmra.mxu0 %v1719
      %v1834 = vpop.f32.mrf.mxu0
      %v1835 = vadd.f32 0.0, %v1834
      %1836 = vmatmul.f32.gmra.mxu0 %v1722
      %v1837 = vpop.f32.mrf.mxu0
      %v1838 = vadd.f32 0.0, %v1837
      %1839 = vdwg.mxu0
      %v1840 = vadd.f32 %v1671, %v1742
      %v1841 = vadd.f32 %v1672, %v1771
      %v1842 = vadd.f32 %v1673, %v1800
      %v1843 = vadd.f32 %v1674, %v1829
      %v1844 = vadd.f32 %v1675, %v1745
      %v1845 = vadd.f32 %v1676, %v1774
      %v1846 = vadd.f32 %v1677, %v1803
      %v1847 = vadd.f32 %v1678, %v1832
      %v1848 = vadd.f32 %v1679, %v1748
      %v1849 = vadd.f32 %v1680, %v1777
      %v1850 = vadd.f32 %v1681, %v1806
      %v1851 = vadd.f32 %v1682, %v1835
      %v1852 = vadd.f32 %v1683, %v1751
      %v1853 = vadd.f32 %v1684, %v1780
      %v1854 = vadd.f32 %v1685, %v1809
      %v1855 = vadd.f32 %v1686, %v1838
      %v1856 = vld [vmem:[%s6] sm:$0xff]
      %v1857 = vld [vmem:[%s6 + $0x8] sm:$0xff]
      %v1858 = vld [vmem:[%s6 + $0x10] sm:$0xff]
      %v1859 = vld [vmem:[%s6 + $0x18] sm:$0xff]
      %1861 = vset.pattern.permute.xlu0 0
      %1862 = vperm.xlu0 %1861, %v1856
      %v1863 = vpop.permute.xlu0 %1862
      %1866 = vset.pattern.permute.xlu0 0
      %1867 = vperm.xlu0 %1866, %v1857
      %v1868 = vpop.permute.xlu0 %1867
      %1871 = vset.pattern.permute.xlu0 0
      %1872 = vperm.xlu0 %1871, %v1858
      %v1873 = vpop.permute.xlu0 %1872
      %1876 = vset.pattern.permute.xlu0 0
      %1877 = vperm.xlu0 %1876, %v1859
      %v1878 = vpop.permute.xlu0 %1877
      %v1880 = vadd.f32 %v1840, %v1863
      %v1881 = vadd.f32 %v1841, %v1863
      %v1882 = vadd.f32 %v1842, %v1863
      %v1883 = vadd.f32 %v1843, %v1863
      %v1884 = vadd.f32 %v1844, %v1868
      %v1885 = vadd.f32 %v1845, %v1868
      %v1886 = vadd.f32 %v1846, %v1868
      %v1887 = vadd.f32 %v1847, %v1868
      %v1888 = vadd.f32 %v1848, %v1873
      %v1889 = vadd.f32 %v1849, %v1873
      %v1890 = vadd.f32 %v1850, %v1873
      %v1891 = vadd.f32 %v1851, %v1873
      %v1892 = vadd.f32 %v1852, %v1878
      %v1893 = vadd.f32 %v1853, %v1878
      %v1894 = vadd.f32 %v1854, %v1878
      %v1895 = vadd.f32 %v1855, %v1878
      %vm1896 = vcmp.gt.f32.partialorder %v1880, 0.0
      %vm1897 = vcmp.gt.f32.partialorder %v1881, 0.0
      %vm1898 = vcmp.gt.f32.partialorder %v1882, 0.0
      %vm1899 = vcmp.gt.f32.partialorder %v1883, 0.0
      %vm1900 = vcmp.gt.f32.partialorder %v1884, 0.0
      %vm1901 = vcmp.gt.f32.partialorder %v1885, 0.0
      %vm1902 = vcmp.gt.f32.partialorder %v1886, 0.0
      %vm1903 = vcmp.gt.f32.partialorder %v1887, 0.0
      %vm1904 = vcmp.gt.f32.partialorder %v1888, 0.0
      %vm1905 = vcmp.gt.f32.partialorder %v1889, 0.0
      %vm1906 = vcmp.gt.f32.partialorder %v1890, 0.0
      %vm1907 = vcmp.gt.f32.partialorder %v1891, 0.0
      %vm1908 = vcmp.gt.f32.partialorder %v1892, 0.0
      %vm1909 = vcmp.gt.f32.partialorder %v1893, 0.0
      %vm1910 = vcmp.gt.f32.partialorder %v1894, 0.0
      %vm1911 = vcmp.gt.f32.partialorder %v1895, 0.0
      %v1912 = vld [vmem:[%s7] sm:$0xff]
      %v1913 = vld [vmem:[%s7 + $0x8] sm:$0xff]
      %v1914 = vld [vmem:[%s7 + $0x10] sm:$0xff]
      %v1915 = vld [vmem:[%s7 + $0x18] sm:$0xff]
      %1917 = vset.pattern.permute.xlu0 0
      %1918 = vperm.xlu0 %1917, %v1912
      %v1919 = vpop.permute.xlu0 %1918
      %1922 = vset.pattern.permute.xlu0 0
      %1923 = vperm.xlu0 %1922, %v1913
      %v1924 = vpop.permute.xlu0 %1923
      %1927 = vset.pattern.permute.xlu0 0
      %1928 = vperm.xlu0 %1927, %v1914
      %v1929 = vpop.permute.xlu0 %1928
      %1932 = vset.pattern.permute.xlu0 0
      %1933 = vperm.xlu0 %1932, %v1915
      %v1934 = vpop.permute.xlu0 %1933
      %v1936 = vmul.f32 %v1880, %v1919
      %v1937 = vmul.f32 %v1881, %v1919
      %v1938 = vmul.f32 %v1882, %v1919
      %v1939 = vmul.f32 %v1883, %v1919
      %v1940 = vmul.f32 %v1884, %v1924
      %v1941 = vmul.f32 %v1885, %v1924
      %v1942 = vmul.f32 %v1886, %v1924
      %v1943 = vmul.f32 %v1887, %v1924
      %v1944 = vmul.f32 %v1888, %v1929
      %v1945 = vmul.f32 %v1889, %v1929
      %v1946 = vmul.f32 %v1890, %v1929
      %v1947 = vmul.f32 %v1891, %v1929
      %v1948 = vmul.f32 %v1892, %v1934
      %v1949 = vmul.f32 %v1893, %v1934
      %v1950 = vmul.f32 %v1894, %v1934
      %v1951 = vmul.f32 %v1895, %v1934
      %v1952 = vsel %vm1896, %v1880, %v1936
      %v1953 = vsel %vm1897, %v1881, %v1937
      %v1954 = vsel %vm1898, %v1882, %v1938
      %v1955 = vsel %vm1899, %v1883, %v1939
      %v1956 = vsel %vm1900, %v1884, %v1940
      %v1957 = vsel %vm1901, %v1885, %v1941
      %v1958 = vsel %vm1902, %v1886, %v1942
      %v1959 = vsel %vm1903, %v1887, %v1943
      %v1960 = vsel %vm1904, %v1888, %v1944
      %v1961 = vsel %vm1905, %v1889, %v1945
      %v1962 = vsel %vm1906, %v1890, %v1946
      %v1963 = vsel %vm1907, %v1891, %v1947
      %v1964 = vsel %vm1908, %v1892, %v1948
      %v1965 = vsel %vm1909, %v1893, %v1949
      %v1966 = vsel %vm1910, %v1894, %v1950
      %v1967 = vsel %vm1911, %v1895, %v1951
      %v1968 = vld [vmem:[%s8] sm:$0xff]
      %v1969 = vld [vmem:[%s8 + $0x8] sm:$0xff]
      %v1970 = vld [vmem:[%s8 + $0x10] sm:$0xff]
      %v1971 = vld [vmem:[%s8 + $0x18] sm:$0xff]
      %1972 = vrot.lane.b32.xlu0 %v1952, 17
      %v1973 = vpop.permute.xlu0 %1972
      %1974 = vrot.lane.b32.xlu0 %v1956, 17
      %v1975 = vpop.permute.xlu0 %1974
      %1976 = vrot.lane.b32.xlu0 %v1960, 17
      %v1977 = vpop.permute.xlu0 %1976
      %1978 = vrot.lane.b32.xlu0 %v1964, 17
      %v1979 = vpop.permute.xlu0 %1978
      %1980 = vrot.lane.b32.xlu0 %v1953, 17
      %v1981 = vpop.permute.xlu0 %1980
      %1982 = vrot.lane.b32.xlu0 %v1957, 17
      %v1983 = vpop.permute.xlu0 %1982
      %1984 = vrot.lane.b32.xlu0 %v1961, 17
      %v1985 = vpop.permute.xlu0 %1984
      %1986 = vrot.lane.b32.xlu0 %v1965, 17
      %v1987 = vpop.permute.xlu0 %1986
      %1988 = vrot.lane.b32.xlu0 %v1954, 17
      %v1989 = vpop.permute.xlu0 %1988
      %1990 = vrot.lane.b32.xlu0 %v1958, 17
      %v1991 = vpop.permute.xlu0 %1990
      %1992 = vrot.lane.b32.xlu0 %v1962, 17
      %v1993 = vpop.permute.xlu0 %1992
      %1994 = vrot.lane.b32.xlu0 %v1966, 17
      %v1995 = vpop.permute.xlu0 %1994
      %1996 = vrot.lane.b32.xlu0 %v1955, 17
      %v1997 = vpop.permute.xlu0 %1996
      %1998 = vrot.lane.b32.xlu0 %v1959, 17
      %v1999 = vpop.permute.xlu0 %1998
      %2000 = vrot.lane.b32.xlu0 %v1963, 17
      %v2001 = vpop.permute.xlu0 %2000
      %2002 = vrot.lane.b32.xlu0 %v1967, 17
      %v2003 = vpop.permute.xlu0 %2002
      %v2004 = vsel %vm439, %v1989, %v1997
      %v2005 = vsel %vm439, %v1991, %v1999
      %v2006 = vsel %vm439, %v1993, %v2001
      %v2007 = vsel %vm439, %v1995, %v2003
      %v2008 = vsel %vm439, %v1981, %v1989
      %v2009 = vsel %vm439, %v1983, %v1991
      %v2010 = vsel %vm439, %v1985, %v1993
      %v2011 = vsel %vm439, %v1987, %v1995
      %v2012 = vsel %vm439, %v1973, %v1981
      %v2013 = vsel %vm439, %v1975, %v1983
      %v2014 = vsel %vm439, %v1977, %v1985
      %v2015 = vsel %vm439, %v1979, %v1987
      %v2016 = vsel %vm439, %v1997, %v1973
      %v2017 = vsel %vm439, %v1999, %v1975
      %v2018 = vsel %vm439, %v2001, %v1977
      %v2019 = vsel %vm439, %v2003, %v1979
      %v2020 = vmul.f32 %v2016, %v903
      %v2021 = vmul.f32 %v2012, %v904
      %v2022 = vmul.f32 %v2008, %v905
      %v2023 = vmul.f32 %v2004, %v906
      %v2024 = vmul.f32 %v2017, %v903
      %v2025 = vmul.f32 %v2013, %v904
      %v2026 = vmul.f32 %v2009, %v905
      %v2027 = vmul.f32 %v2005, %v906
      %v2028 = vmul.f32 %v2018, %v903
      %v2029 = vmul.f32 %v2014, %v904
      %v2030 = vmul.f32 %v2010, %v905
      %v2031 = vmul.f32 %v2006, %v906
      %v2032 = vmul.f32 %v2019, %v903
      %v2033 = vmul.f32 %v2015, %v904
      %v2034 = vmul.f32 %v2011, %v905
      %v2035 = vmul.f32 %v2007, %v906
      %2037 = vset.pattern.permute.xlu0 0
      %2038 = vperm.xlu0 %2037, %v1968
      %v2039 = vpop.permute.xlu0 %2038
      %2042 = vset.pattern.permute.xlu0 0
      %2043 = vperm.xlu0 %2042, %v1969
      %v2044 = vpop.permute.xlu0 %2043
      %2047 = vset.pattern.permute.xlu0 0
      %2048 = vperm.xlu0 %2047, %v1970
      %v2049 = vpop.permute.xlu0 %2048
      %2052 = vset.pattern.permute.xlu0 0
      %2053 = vperm.xlu0 %2052, %v1971
      %v2054 = vpop.permute.xlu0 %2053
      %v2056 = vmul.f32 %v2039, %v2020
      %v2057 = vmul.f32 %v2039, %v2021
      %v2058 = vmul.f32 %v2039, %v2022
      %v2059 = vmul.f32 %v2039, %v2023
      %v2060 = vmul.f32 %v2044, %v2024
      %v2061 = vmul.f32 %v2044, %v2025
      %v2062 = vmul.f32 %v2044, %v2026
      %v2063 = vmul.f32 %v2044, %v2027
      %v2064 = vmul.f32 %v2049, %v2028
      %v2065 = vmul.f32 %v2049, %v2029
      %v2066 = vmul.f32 %v2049, %v2030
      %v2067 = vmul.f32 %v2049, %v2031
      %v2068 = vmul.f32 %v2054, %v2032
      %v2069 = vmul.f32 %v2054, %v2033
      %v2070 = vmul.f32 %v2054, %v2034
      %v2071 = vmul.f32 %v2054, %v2035
      %v2072 = vadd.f32 %v2056, 0.0
      %v2073 = vadd.f32 %v2057, 0.0
      %v2074 = vadd.f32 %v2058, 0.0
      %v2075 = vadd.f32 %v2059, 0.0
      %v2076 = vadd.f32 %v2060, 0.0
      %v2077 = vadd.f32 %v2061, 0.0
      %v2078 = vadd.f32 %v2062, 0.0
      %v2079 = vadd.f32 %v2063, 0.0
      %v2080 = vadd.f32 %v2064, 0.0
      %v2081 = vadd.f32 %v2065, 0.0
      %v2082 = vadd.f32 %v2066, 0.0
      %v2083 = vadd.f32 %v2067, 0.0
      %v2084 = vadd.f32 %v2068, 0.0
      %v2085 = vadd.f32 %v2069, 0.0
      %v2086 = vadd.f32 %v2070, 0.0
      %v2087 = vadd.f32 %v2071, 0.0
      %2088 = vrot.lane.b32.xlu0 %v1952, 16
      %v2089 = vpop.permute.xlu0 %2088
      %2090 = vrot.lane.b32.xlu0 %v1956, 16
      %v2091 = vpop.permute.xlu0 %2090
      %2092 = vrot.lane.b32.xlu0 %v1960, 16
      %v2093 = vpop.permute.xlu0 %2092
      %2094 = vrot.lane.b32.xlu0 %v1964, 16
      %v2095 = vpop.permute.xlu0 %2094
      %2096 = vrot.lane.b32.xlu0 %v1953, 16
      %v2097 = vpop.permute.xlu0 %2096
      %2098 = vrot.lane.b32.xlu0 %v1957, 16
      %v2099 = vpop.permute.xlu0 %2098
      %2100 = vrot.lane.b32.xlu0 %v1961, 16
      %v2101 = vpop.permute.xlu0 %2100
      %2102 = vrot.lane.b32.xlu0 %v1965, 16
      %v2103 = vpop.permute.xlu0 %2102
      %2104 = vrot.lane.b32.xlu0 %v1954, 16
      %v2105 = vpop.permute.xlu0 %2104
      %2106 = vrot.lane.b32.xlu0 %v1958, 16
      %v2107 = vpop.permute.xlu0 %2106
      %2108 = vrot.lane.b32.xlu0 %v1962, 16
      %v2109 = vpop.permute.xlu0 %2108
      %2110 = vrot.lane.b32.xlu0 %v1966, 16
      %v2111 = vpop.permute.xlu0 %2110
      %2112 = vrot.lane.b32.xlu0 %v1955, 16
      %v2113 = vpop.permute.xlu0 %2112
      %2114 = vrot.lane.b32.xlu0 %v1959, 16
      %v2115 = vpop.permute.xlu0 %2114
      %2116 = vrot.lane.b32.xlu0 %v1963, 16
      %v2117 = vpop.permute.xlu0 %2116
      %2118 = vrot.lane.b32.xlu0 %v1967, 16
      %v2119 = vpop.permute.xlu0 %2118
      %v2120 = vsel %vm512, %v2105, %v2113
      %v2121 = vsel %vm512, %v2107, %v2115
      %v2122 = vsel %vm512, %v2109, %v2117
      %v2123 = vsel %vm512, %v2111, %v2119
      %v2124 = vsel %vm512, %v2097, %v2105
      %v2125 = vsel %vm512, %v2099, %v2107
      %v2126 = vsel %vm512, %v2101, %v2109
      %v2127 = vsel %vm512, %v2103, %v2111
      %v2128 = vsel %vm512, %v2089, %v2097
      %v2129 = vsel %vm512, %v2091, %v2099
      %v2130 = vsel %vm512, %v2093, %v2101
      %v2131 = vsel %vm512, %v2095, %v2103
      %v2132 = vsel %vm512, %v2113, %v2089
      %v2133 = vsel %vm512, %v2115, %v2091
      %v2134 = vsel %vm512, %v2117, %v2093
      %v2135 = vsel %vm512, %v2119, %v2095
      %v2136 = vmul.f32 %v2132, %v976
      %v2137 = vmul.f32 %v2128, %v977
      %v2138 = vmul.f32 %v2124, %v978
      %v2139 = vmul.f32 %v2120, %v979
      %v2140 = vmul.f32 %v2133, %v976
      %v2141 = vmul.f32 %v2129, %v977
      %v2142 = vmul.f32 %v2125, %v978
      %v2143 = vmul.f32 %v2121, %v979
      %v2144 = vmul.f32 %v2134, %v976
      %v2145 = vmul.f32 %v2130, %v977
      %v2146 = vmul.f32 %v2126, %v978
      %v2147 = vmul.f32 %v2122, %v979
      %v2148 = vmul.f32 %v2135, %v976
      %v2149 = vmul.f32 %v2131, %v977
      %v2150 = vmul.f32 %v2127, %v978
      %v2151 = vmul.f32 %v2123, %v979
      %2152 = vset.pattern.permute.xlu0 1
      %2153 = vperm.xlu0 %2152, %v1968
      %v2154 = vpop.permute.xlu0 %2153
      %2156 = vset.pattern.permute.xlu0 1
      %2157 = vperm.xlu0 %2156, %v1969
      %v2158 = vpop.permute.xlu0 %2157
      %2160 = vset.pattern.permute.xlu0 1
      %2161 = vperm.xlu0 %2160, %v1970
      %v2162 = vpop.permute.xlu0 %2161
      %2164 = vset.pattern.permute.xlu0 1
      %2165 = vperm.xlu0 %2164, %v1971
      %v2166 = vpop.permute.xlu0 %2165
      %v2168 = vmul.f32 %v2154, %v2136
      %v2169 = vmul.f32 %v2154, %v2137
      %v2170 = vmul.f32 %v2154, %v2138
      %v2171 = vmul.f32 %v2154, %v2139
      %v2172 = vmul.f32 %v2158, %v2140
      %v2173 = vmul.f32 %v2158, %v2141
      %v2174 = vmul.f32 %v2158, %v2142
      %v2175 = vmul.f32 %v2158, %v2143
      %v2176 = vmul.f32 %v2162, %v2144
      %v2177 = vmul.f32 %v2162, %v2145
      %v2178 = vmul.f32 %v2162, %v2146
      %v2179 = vmul.f32 %v2162, %v2147
      %v2180 = vmul.f32 %v2166, %v2148
      %v2181 = vmul.f32 %v2166, %v2149
      %v2182 = vmul.f32 %v2166, %v2150
      %v2183 = vmul.f32 %v2166, %v2151
      %v2184 = vadd.f32 %v2072, %v2168
      %v2185 = vadd.f32 %v2073, %v2169
      %v2186 = vadd.f32 %v2074, %v2170
      %v2187 = vadd.f32 %v2075, %v2171
      %v2188 = vadd.f32 %v2076, %v2172
      %v2189 = vadd.f32 %v2077, %v2173
      %v2190 = vadd.f32 %v2078, %v2174
      %v2191 = vadd.f32 %v2079, %v2175
      %v2192 = vadd.f32 %v2080, %v2176
      %v2193 = vadd.f32 %v2081, %v2177
      %v2194 = vadd.f32 %v2082, %v2178
      %v2195 = vadd.f32 %v2083, %v2179
      %v2196 = vadd.f32 %v2084, %v2180
      %v2197 = vadd.f32 %v2085, %v2181
      %v2198 = vadd.f32 %v2086, %v2182
      %v2199 = vadd.f32 %v2087, %v2183
      %2200 = vrot.lane.b32.xlu0 %v1952, 15
      %v2201 = vpop.permute.xlu0 %2200
      %2202 = vrot.lane.b32.xlu0 %v1956, 15
      %v2203 = vpop.permute.xlu0 %2202
      %2204 = vrot.lane.b32.xlu0 %v1960, 15
      %v2205 = vpop.permute.xlu0 %2204
      %2206 = vrot.lane.b32.xlu0 %v1964, 15
      %v2207 = vpop.permute.xlu0 %2206
      %2208 = vrot.lane.b32.xlu0 %v1953, 15
      %v2209 = vpop.permute.xlu0 %2208
      %2210 = vrot.lane.b32.xlu0 %v1957, 15
      %v2211 = vpop.permute.xlu0 %2210
      %2212 = vrot.lane.b32.xlu0 %v1961, 15
      %v2213 = vpop.permute.xlu0 %2212
      %2214 = vrot.lane.b32.xlu0 %v1965, 15
      %v2215 = vpop.permute.xlu0 %2214
      %2216 = vrot.lane.b32.xlu0 %v1954, 15
      %v2217 = vpop.permute.xlu0 %2216
      %2218 = vrot.lane.b32.xlu0 %v1958, 15
      %v2219 = vpop.permute.xlu0 %2218
      %2220 = vrot.lane.b32.xlu0 %v1962, 15
      %v2221 = vpop.permute.xlu0 %2220
      %2222 = vrot.lane.b32.xlu0 %v1966, 15
      %v2223 = vpop.permute.xlu0 %2222
      %2224 = vrot.lane.b32.xlu0 %v1955, 15
      %v2225 = vpop.permute.xlu0 %2224
      %2226 = vrot.lane.b32.xlu0 %v1959, 15
      %v2227 = vpop.permute.xlu0 %2226
      %2228 = vrot.lane.b32.xlu0 %v1963, 15
      %v2229 = vpop.permute.xlu0 %2228
      %2230 = vrot.lane.b32.xlu0 %v1967, 15
      %v2231 = vpop.permute.xlu0 %2230
      %v2232 = vsel %vm593, %v2217, %v2225
      %v2233 = vsel %vm593, %v2219, %v2227
      %v2234 = vsel %vm593, %v2221, %v2229
      %v2235 = vsel %vm593, %v2223, %v2231
      %v2236 = vsel %vm593, %v2209, %v2217
      %v2237 = vsel %vm593, %v2211, %v2219
      %v2238 = vsel %vm593, %v2213, %v2221
      %v2239 = vsel %vm593, %v2215, %v2223
      %v2240 = vsel %vm593, %v2201, %v2209
      %v2241 = vsel %vm593, %v2203, %v2211
      %v2242 = vsel %vm593, %v2205, %v2213
      %v2243 = vsel %vm593, %v2207, %v2215
      %v2244 = vsel %vm593, %v2225, %v2201
      %v2245 = vsel %vm593, %v2227, %v2203
      %v2246 = vsel %vm593, %v2229, %v2205
      %v2247 = vsel %vm593, %v2231, %v2207
      %v2248 = vmul.f32 %v2244, %v1306
      %v2249 = vmul.f32 %v2240, %v1307
      %v2250 = vmul.f32 %v2236, %v1308
      %v2251 = vmul.f32 %v2232, %v1309
      %v2252 = vmul.f32 %v2245, %v1306
      %v2253 = vmul.f32 %v2241, %v1307
      %v2254 = vmul.f32 %v2237, %v1308
      %v2255 = vmul.f32 %v2233, %v1309
      %v2256 = vmul.f32 %v2246, %v1306
      %v2257 = vmul.f32 %v2242, %v1307
      %v2258 = vmul.f32 %v2238, %v1308
      %v2259 = vmul.f32 %v2234, %v1309
      %v2260 = vmul.f32 %v2247, %v1306
      %v2261 = vmul.f32 %v2243, %v1307
      %v2262 = vmul.f32 %v2239, %v1308
      %v2263 = vmul.f32 %v2235, %v1309
      %2264 = vset.pattern.permute.xlu0 2
      %2265 = vperm.xlu0 %2264, %v1968
      %v2266 = vpop.permute.xlu0 %2265
      %2268 = vset.pattern.permute.xlu0 2
      %2269 = vperm.xlu0 %2268, %v1969
      %v2270 = vpop.permute.xlu0 %2269
      %2272 = vset.pattern.permute.xlu0 2
      %2273 = vperm.xlu0 %2272, %v1970
      %v2274 = vpop.permute.xlu0 %2273
      %2276 = vset.pattern.permute.xlu0 2
      %2277 = vperm.xlu0 %2276, %v1971
      %v2278 = vpop.permute.xlu0 %2277
      %v2280 = vmul.f32 %v2266, %v2248
      %v2281 = vmul.f32 %v2266, %v2249
      %v2282 = vmul.f32 %v2266, %v2250
      %v2283 = vmul.f32 %v2266, %v2251
      %v2284 = vmul.f32 %v2270, %v2252
      %v2285 = vmul.f32 %v2270, %v2253
      %v2286 = vmul.f32 %v2270, %v2254
      %v2287 = vmul.f32 %v2270, %v2255
      %v2288 = vmul.f32 %v2274, %v2256
      %v2289 = vmul.f32 %v2274, %v2257
      %v2290 = vmul.f32 %v2274, %v2258
      %v2291 = vmul.f32 %v2274, %v2259
      %v2292 = vmul.f32 %v2278, %v2260
      %v2293 = vmul.f32 %v2278, %v2261
      %v2294 = vmul.f32 %v2278, %v2262
      %v2295 = vmul.f32 %v2278, %v2263
      %v2296 = vadd.f32 %v2184, %v2280
      %v2297 = vadd.f32 %v2185, %v2281
      %v2298 = vadd.f32 %v2186, %v2282
      %v2299 = vadd.f32 %v2187, %v2283
      %v2300 = vadd.f32 %v2188, %v2284
      %v2301 = vadd.f32 %v2189, %v2285
      %v2302 = vadd.f32 %v2190, %v2286
      %v2303 = vadd.f32 %v2191, %v2287
      %v2304 = vadd.f32 %v2192, %v2288
      %v2305 = vadd.f32 %v2193, %v2289
      %v2306 = vadd.f32 %v2194, %v2290
      %v2307 = vadd.f32 %v2195, %v2291
      %v2308 = vadd.f32 %v2196, %v2292
      %v2309 = vadd.f32 %v2197, %v2293
      %v2310 = vadd.f32 %v2198, %v2294
      %v2311 = vadd.f32 %v2199, %v2295
      %2312 = vrot.lane.b32.xlu0 %v1952, 1
      %v2313 = vpop.permute.xlu0 %2312
      %2314 = vrot.lane.b32.xlu0 %v1956, 1
      %v2315 = vpop.permute.xlu0 %2314
      %2316 = vrot.lane.b32.xlu0 %v1960, 1
      %v2317 = vpop.permute.xlu0 %2316
      %2318 = vrot.lane.b32.xlu0 %v1964, 1
      %v2319 = vpop.permute.xlu0 %2318
      %2320 = vrot.lane.b32.xlu0 %v1953, 1
      %v2321 = vpop.permute.xlu0 %2320
      %2322 = vrot.lane.b32.xlu0 %v1957, 1
      %v2323 = vpop.permute.xlu0 %2322
      %2324 = vrot.lane.b32.xlu0 %v1961, 1
      %v2325 = vpop.permute.xlu0 %2324
      %2326 = vrot.lane.b32.xlu0 %v1965, 1
      %v2327 = vpop.permute.xlu0 %2326
      %2328 = vrot.lane.b32.xlu0 %v1954, 1
      %v2329 = vpop.permute.xlu0 %2328
      %2330 = vrot.lane.b32.xlu0 %v1958, 1
      %v2331 = vpop.permute.xlu0 %2330
      %2332 = vrot.lane.b32.xlu0 %v1962, 1
      %v2333 = vpop.permute.xlu0 %2332
      %2334 = vrot.lane.b32.xlu0 %v1966, 1
      %v2335 = vpop.permute.xlu0 %2334
      %2336 = vrot.lane.b32.xlu0 %v1955, 1
      %v2337 = vpop.permute.xlu0 %2336
      %2338 = vrot.lane.b32.xlu0 %v1959, 1
      %v2339 = vpop.permute.xlu0 %2338
      %2340 = vrot.lane.b32.xlu0 %v1963, 1
      %v2341 = vpop.permute.xlu0 %2340
      %2342 = vrot.lane.b32.xlu0 %v1967, 1
      %v2343 = vpop.permute.xlu0 %2342
      %v2344 = vsel %vm670, %v2329, %v2337
      %v2345 = vsel %vm670, %v2331, %v2339
      %v2346 = vsel %vm670, %v2333, %v2341
      %v2347 = vsel %vm670, %v2335, %v2343
      %v2348 = vsel %vm670, %v2321, %v2329
      %v2349 = vsel %vm670, %v2323, %v2331
      %v2350 = vsel %vm670, %v2325, %v2333
      %v2351 = vsel %vm670, %v2327, %v2335
      %v2352 = vsel %vm670, %v2313, %v2321
      %v2353 = vsel %vm670, %v2315, %v2323
      %v2354 = vsel %vm670, %v2317, %v2325
      %v2355 = vsel %vm670, %v2319, %v2327
      %v2356 = vsel %vm670, %v2337, %v2313
      %v2357 = vsel %vm670, %v2339, %v2315
      %v2358 = vsel %vm670, %v2341, %v2317
      %v2359 = vsel %vm670, %v2343, %v2319
      %v2360 = vmul.f32 %v2356, %v1523
      %v2361 = vmul.f32 %v2352, %v1524
      %v2362 = vmul.f32 %v2348, %v1525
      %v2363 = vmul.f32 %v2344, %v1526
      %v2364 = vmul.f32 %v2357, %v1523
      %v2365 = vmul.f32 %v2353, %v1524
      %v2366 = vmul.f32 %v2349, %v1525
      %v2367 = vmul.f32 %v2345, %v1526
      %v2368 = vmul.f32 %v2358, %v1523
      %v2369 = vmul.f32 %v2354, %v1524
      %v2370 = vmul.f32 %v2350, %v1525
      %v2371 = vmul.f32 %v2346, %v1526
      %v2372 = vmul.f32 %v2359, %v1523
      %v2373 = vmul.f32 %v2355, %v1524
      %v2374 = vmul.f32 %v2351, %v1525
      %v2375 = vmul.f32 %v2347, %v1526
      %2376 = vset.pattern.permute.xlu0 3
      %2377 = vperm.xlu0 %2376, %v1968
      %v2378 = vpop.permute.xlu0 %2377
      %2380 = vset.pattern.permute.xlu0 3
      %2381 = vperm.xlu0 %2380, %v1969
      %v2382 = vpop.permute.xlu0 %2381
      %2384 = vset.pattern.permute.xlu0 3
      %2385 = vperm.xlu0 %2384, %v1970
      %v2386 = vpop.permute.xlu0 %2385
      %2388 = vset.pattern.permute.xlu0 3
      %2389 = vperm.xlu0 %2388, %v1971
      %v2390 = vpop.permute.xlu0 %2389
      %v2392 = vmul.f32 %v2378, %v2360
      %v2393 = vmul.f32 %v2378, %v2361
      %v2394 = vmul.f32 %v2378, %v2362
      %v2395 = vmul.f32 %v2378, %v2363
      %v2396 = vmul.f32 %v2382, %v2364
      %v2397 = vmul.f32 %v2382, %v2365
      %v2398 = vmul.f32 %v2382, %v2366
      %v2399 = vmul.f32 %v2382, %v2367
      %v2400 = vmul.f32 %v2386, %v2368
      %v2401 = vmul.f32 %v2386, %v2369
      %v2402 = vmul.f32 %v2386, %v2370
      %v2403 = vmul.f32 %v2386, %v2371
      %v2404 = vmul.f32 %v2390, %v2372
      %v2405 = vmul.f32 %v2390, %v2373
      %v2406 = vmul.f32 %v2390, %v2374
      %v2407 = vmul.f32 %v2390, %v2375
      %v2408 = vadd.f32 %v2296, %v2392
      %v2409 = vadd.f32 %v2297, %v2393
      %v2410 = vadd.f32 %v2298, %v2394
      %v2411 = vadd.f32 %v2299, %v2395
      %v2412 = vadd.f32 %v2300, %v2396
      %v2413 = vadd.f32 %v2301, %v2397
      %v2414 = vadd.f32 %v2302, %v2398
      %v2415 = vadd.f32 %v2303, %v2399
      %v2416 = vadd.f32 %v2304, %v2400
      %v2417 = vadd.f32 %v2305, %v2401
      %v2418 = vadd.f32 %v2306, %v2402
      %v2419 = vadd.f32 %v2307, %v2403
      %v2420 = vadd.f32 %v2308, %v2404
      %v2421 = vadd.f32 %v2309, %v2405
      %v2422 = vadd.f32 %v2310, %v2406
      %v2423 = vadd.f32 %v2311, %v2407
      %v2424 = vmul.f32 %v1952, %v1692
      %v2425 = vmul.f32 %v1953, %v1693
      %v2426 = vmul.f32 %v1954, %v1694
      %v2427 = vmul.f32 %v1955, %v1695
      %v2428 = vmul.f32 %v1956, %v1692
      %v2429 = vmul.f32 %v1957, %v1693
      %v2430 = vmul.f32 %v1958, %v1694
      %v2431 = vmul.f32 %v1959, %v1695
      %v2432 = vmul.f32 %v1960, %v1692
      %v2433 = vmul.f32 %v1961, %v1693
      %v2434 = vmul.f32 %v1962, %v1694
      %v2435 = vmul.f32 %v1963, %v1695
      %v2436 = vmul.f32 %v1964, %v1692
      %v2437 = vmul.f32 %v1965, %v1693
      %v2438 = vmul.f32 %v1966, %v1694
      %v2439 = vmul.f32 %v1967, %v1695
      %2440 = vset.pattern.permute.xlu0 4
      %2441 = vperm.xlu0 %2440, %v1968
      %v2442 = vpop.permute.xlu0 %2441
      %2444 = vset.pattern.permute.xlu0 4
      %2445 = vperm.xlu0 %2444, %v1969
      %v2446 = vpop.permute.xlu0 %2445
      %2448 = vset.pattern.permute.xlu0 4
      %2449 = vperm.xlu0 %2448, %v1970
      %v2450 = vpop.permute.xlu0 %2449
      %2452 = vset.pattern.permute.xlu0 4
      %2453 = vperm.xlu0 %2452, %v1971
      %v2454 = vpop.permute.xlu0 %2453
      %v2456 = vmul.f32 %v2442, %v2424
      %v2457 = vmul.f32 %v2442, %v2425
      %v2458 = vmul.f32 %v2442, %v2426
      %v2459 = vmul.f32 %v2442, %v2427
      %v2460 = vmul.f32 %v2446, %v2428
      %v2461 = vmul.f32 %v2446, %v2429
      %v2462 = vmul.f32 %v2446, %v2430
      %v2463 = vmul.f32 %v2446, %v2431
      %v2464 = vmul.f32 %v2450, %v2432
      %v2465 = vmul.f32 %v2450, %v2433
      %v2466 = vmul.f32 %v2450, %v2434
      %v2467 = vmul.f32 %v2450, %v2435
      %v2468 = vmul.f32 %v2454, %v2436
      %v2469 = vmul.f32 %v2454, %v2437
      %v2470 = vmul.f32 %v2454, %v2438
      %v2471 = vmul.f32 %v2454, %v2439
      %v2472 = vadd.f32 %v2408, %v2456
      %v2473 = vadd.f32 %v2409, %v2457
      %v2474 = vadd.f32 %v2410, %v2458
      %v2475 = vadd.f32 %v2411, %v2459
      %v2476 = vadd.f32 %v2412, %v2460
      %v2477 = vadd.f32 %v2413, %v2461
      %v2478 = vadd.f32 %v2414, %v2462
      %v2479 = vadd.f32 %v2415, %v2463
      %v2480 = vadd.f32 %v2416, %v2464
      %v2481 = vadd.f32 %v2417, %v2465
      %v2482 = vadd.f32 %v2418, %v2466
      %v2483 = vadd.f32 %v2419, %v2467
      %v2484 = vadd.f32 %v2420, %v2468
      %v2485 = vadd.f32 %v2421, %v2469
      %v2486 = vadd.f32 %v2422, %v2470
      %v2487 = vadd.f32 %v2423, %v2471
      %v2488 = vadd.f32 %v2472, %v2476
      %v2489 = vadd.f32 %v2488, %v2480
      %v2490 = vadd.f32 %v2489, %v2484
      %v2491 = vrot.slane %v2490, 4
      %v2492 = vadd.f32 %v2490, %v2491
      %v2493 = vrot.slane %v2492, 2
      %v2494 = vadd.f32 %v2492, %v2493
      %v2495 = vrot.slane %v2494, 1
      %v2496 = vadd.f32 %v2494, %v2495
      %v2497 = vadd.f32 %v2473, %v2477
      %v2498 = vadd.f32 %v2497, %v2481
      %v2499 = vadd.f32 %v2498, %v2485
      %v2500 = vrot.slane %v2499, 4
      %v2501 = vadd.f32 %v2499, %v2500
      %v2502 = vrot.slane %v2501, 2
      %v2503 = vadd.f32 %v2501, %v2502
      %v2504 = vrot.slane %v2503, 1
      %v2505 = vadd.f32 %v2503, %v2504
      %v2506 = vadd.f32 %v2474, %v2478
      %v2507 = vadd.f32 %v2506, %v2482
      %v2508 = vadd.f32 %v2507, %v2486
      %v2509 = vrot.slane %v2508, 4
      %v2510 = vadd.f32 %v2508, %v2509
      %v2511 = vrot.slane %v2510, 2
      %v2512 = vadd.f32 %v2510, %v2511
      %v2513 = vrot.slane %v2512, 1
      %v2514 = vadd.f32 %v2512, %v2513
      %v2515 = vadd.f32 %v2475, %v2479
      %v2516 = vadd.f32 %v2515, %v2483
      %v2517 = vadd.f32 %v2516, %v2487
      %v2518 = vrot.slane %v2517, 4
      %v2519 = vadd.f32 %v2517, %v2518
      %v2520 = vrot.slane %v2519, 2
      %v2521 = vadd.f32 %v2519, %v2520
      %v2522 = vrot.slane %v2521, 1
      %v2523 = vadd.f32 %v2521, %v2522
      %v2524 = vld [vmem:[#allocation2] sm:$0x1]
      %2526 = vset.pattern.permute.xlu0 0
      %2527 = vperm.xlu0 %2526, %v2524
      %v2528 = vpop.permute.xlu0 %2527
      %v2530 = vperm.slane %v2528, 0
      %v2531 = vadd.f32 %v2496, %v2530
      %v2532 = vadd.f32 %v2505, %v2530
      %v2533 = vadd.f32 %v2514, %v2530
      %v2534 = vadd.f32 %v2523, %v2530
      %v2535 = vsub.f32 0.0, %v2531
      %v2536 = vsub.f32 0.0, %v2532
      %v2537 = vsub.f32 0.0, %v2533
      %v2538 = vsub.f32 0.0, %v2534
      %v2539 = vmul.f32 %v2535, 1.442695
      %v2540 = vpow.pop %v2539
      %v2541 = vmul.f32 %v2536, 1.442695
      %v2542 = vpow.pop %v2541
      %v2543 = vmul.f32 %v2537, 1.442695
      %v2544 = vpow.pop %v2543
      %v2545 = vmul.f32 %v2538, 1.442695
      %v2546 = vpow.pop %v2545
      %v2547 = vadd.f32 %v2540, 1.0
      %v2548 = vadd.f32 %v2542, 1.0
      %v2549 = vadd.f32 %v2544, 1.0
      %v2550 = vadd.f32 %v2546, 1.0
      %v2551 = vrcp.pop %v2547
      %v2552 = vrcp.pop %v2548
      %v2553 = vrcp.pop %v2549
      %v2554 = vrcp.pop %v2550
      %v2555 = vld [vmem:[%s10] sm:$0xf]
      %v2557 = vperm.slane %v2555, 0
      %v2558 = vperm.slane %v2555, 1
      %v2559 = vperm.slane %v2555, 2
      %v2560 = vperm.slane %v2555, 3
      %v2565 = vmul.f32 %v2551, %v2557
      %v2566 = vmul.f32 %v2552, %v2558
      %v2567 = vmul.f32 %v2553, %v2559
      %v2568 = vmul.f32 %v2554, %v2560
      %v2569 = vld [vmem:[%s11] sm:$0xf]
      %v2571 = vperm.slane %v2569, 0
      %v2572 = vperm.slane %v2569, 1
      %v2573 = vperm.slane %v2569, 2
      %v2574 = vperm.slane %v2569, 3
      %v2579 = vadd.f32 %v2565, %v2571
      %v2580 = vadd.f32 %v2566, %v2572
      %v2581 = vadd.f32 %v2567, %v2573
      %v2582 = vadd.f32 %v2568, %v2574
      %v2587 = vrot.slane %v2580, 7
      %v2588 = vrot.slane %v2581, 6
      %v2589 = vrot.slane %v2582, 5
      %vm2590 = vcmask 1040384
      %v2591 = vsel %vm2590, %v2579, %v2587
      %vm2592 = vcmask 1042434
      %v2593 = vsel %vm2592, %v2588, %v2589
      %vm2594 = vcmask 1041408
      %v2595 = vsel %vm2594, %v2591, %v2593
      %v2597 = vlaneseq
      %vm2598 = vcmp.ge.s32.totalorder %v2597, 0
      %vm2599 = vcmp.lt.s32.totalorder %v2597, 512
      %vm2600 = vmand %vm2598, %vm2599
      %2601 = vst.msk [vmem:[%s410] sm:$0xf] %vm2600, %v2595
      %p2602 = scmp.lt.s32.totalorder %s25, 1
      %s2603 = scalar_select %p2602, %s25, 1
      %s2604 = smul.addr %s2603, 4
      %s2605 = scalar_lea.vmem %s12, %s2604
      // Predicated region
      $region69: #{forward.1} parent=67 // pred_check
        %p2606 = pneg %p300
      $region70: #{forward.1} parent=67 // pred_check_branch
        %2608 = sbr.rel (%p2606) target = $region72
      $region71: #{forward.1} parent=67 // pred_region
        _
      $region72: #{forward.1} parent=67 // pred_fallthru
        _
    $region68: #{forward.1} parent=5 // pred_fallthru
      _
    %p2609 = scmp.le.s32.totalorder 2, %s20
    // Predicated region
    $region73: #{forward.1} parent=5 // pred_check
      %p2610 = pneg %p2609
    $region74: #{forward.1} parent=5 // pred_check_branch
      %2612 = sbr.rel (%p2610) target = $region76
    $region75: #{forward.1} parent=5 // pred_region
      %s2613 = ssub.s32 %s20, 2
      // Predicated region
      $region77: #{forward.1} parent=75 // pred_check
        %p2614 = pneg %p306
      $region78: #{forward.1} parent=75 // pred_check_branch
        %2616 = sbr.rel (%p2614) target = $region80
      $region79: #{forward.1} parent=75 // pred_region
        %p2617 = scmp.lt.s32.totalorder %s26, 1
        %s2618 = scalar_select %p2617, %s26, 1
        %s2619 = smul.addr %s2618, 4
        %s2620 = scalar_lea.vmem %s12, %s2619
      $region80: #{forward.1} parent=75 // pred_fallthru
        _
    $region76: #{forward.1} parent=5 // pred_fallthru
      _
  $region6: #{forward.1} parent=0 // loop_footer
    %s24 = sadd.s32 1, %s20
  $region7: #{forward.1} parent=0 // loop_footer_branch
    %19 = sbr.rel target = $region3
  $region8: #{forward.1} parent=0 // loop_exit
    _

</llo_original>
